<compile_context>
chip_gen: v7x
topology: tpu7x:2x2x1
jax: 0.10.0
libtpu: 0.0.40
codegen_flags: <defaults>
</compile_context>

<pallas_src>
import jax
import jax.numpy as jnp
from jax import lax
from jax.experimental import pallas as pl
from jax.experimental.pallas import tpu as pltpu

IMG = 64        # image height / width
CH = 3          # channels
PATCH = 16      # patch size -> (64/16)^2 = 16 patches
NSIDE = IMG // PATCH
NPATCH = NSIDE * NSIDE
HID = 32        # hidden dim
MLP = 64        # MLP hidden dim
NQ = 4          # number of text queries

# ---- packed lane-dense output layout (NPATCH, 128) ----
OUT_LANES = 128
_L_LOG = 0                 # lanes [0, NQ)        per-query logits
_L_BOX = NQ                # lanes [NQ, NQ+4)     boxes (cx, cy, w, h)
_L_SCR = NQ + 4            # lane  NQ+4           sigmoid(max_q logits)
_L_LBL = NQ + 5            # lane  NQ+5           argmax_q label (as f32)
_L_PT = NQ + 6             # lanes NQ+6 / NQ+7    (cx, cy + h/2) of best patch
_L_BEST = NQ + 8           # lane  NQ+8           best-patch index (as f32)
_N_USED = NQ + 9           # 13 used lanes, rest zero-padded

# ---- slab A (lane width 32): row-concatenated, 8-row-aligned sections ----
_A_PW, _A_POS, _A_LN, _A_B3, _A_WO, _A_W2, _A_WB1, _A_TXT = (
    0, 768, 784, 792, 800, 832, 896, 928)
_A_ROWS = 936
# slab A rows: patch_w(768) | pos+patch_b(16) | ln{1g,1b,2g,2b,fg,fb}(6,pad8)
#              | {bo,b2,bb1}(3,pad8) | wo(32) | w2(64) | wb1(32) | text(4,pad8)

# ---- slab B (lane width 96): row-concatenated, 8-row-aligned sections ----
_B_WQKV, _B_BQKV, _B_W1, _B_B1, _B_WHD, _B_BHD, _B_WB2, _B_BB = (
    0, 32, 40, 72, 80, 112, 120, 152)
_B_ROWS = 168
_B_LANES = 3 * HID   # 96
# slab B rows: wqkv(32,96) | bqkv(1,pad8) | w1(32,:64) | b1(1,:64,pad8)
#              | whead(32,:66) | bhead(1,:66,pad8) | wb2(32,:4) | box_bias(16,:4)
# whead column order: [wc(32) | wb0(32) | wsh(1) | wsc(1)]  (lane-aligned 0/32)


# --------------------------------------------------------------------------
# Pallas kernel (single fused call)
# --------------------------------------------------------------------------
def _layernorm(x, g, b, eps=1e-5):
    mu = jnp.mean(x, axis=-1, keepdims=True)
    var = jnp.mean(jnp.square(x - mu), axis=-1, keepdims=True)
    return (x - mu) * jax.lax.rsqrt(var + eps) * g + b


def _owlv2_kernel(patches_ref, a_ref, b_ref, out_ref):
    # ---- unpack parameter slabs (static slices of VMEM refs) ----
    patch_w = a_ref[_A_PW:_A_PW + CH * PATCH * PATCH, :]       # (768, 32)
    pos = a_ref[_A_POS:_A_POS + NPATCH, :]                     # (16, 32) patch_b folded
    ln1_g = a_ref[_A_LN + 0:_A_LN + 1, :]
    ln1_b = a_ref[_A_LN + 1:_A_LN + 2, :]
    ln2_g = a_ref[_A_LN + 2:_A_LN + 3, :]
    ln2_b = a_ref[_A_LN + 3:_A_LN + 4, :]
    lnf_g = a_ref[_A_LN + 4:_A_LN + 5, :]
    lnf_b = a_ref[_A_LN + 5:_A_LN + 6, :]
    bo = a_ref[_A_B3 + 0:_A_B3 + 1, :]
    b2 = a_ref[_A_B3 + 1:_A_B3 + 2, :]
    bb1 = a_ref[_A_B3 + 2:_A_B3 + 3, :]
    wo = a_ref[_A_WO:_A_WO + HID, :]                            # (32, 32)
    w2 = a_ref[_A_W2:_A_W2 + MLP, :]                            # (64, 32)
    wb1 = a_ref[_A_WB1:_A_WB1 + HID, :]                         # (32, 32)
    txt = a_ref[_A_TXT:_A_TXT + NQ, :]                          # (4, 32)

    wqkv = b_ref[_B_WQKV:_B_WQKV + HID, :]                      # (32, 96)
    bqkv = b_ref[_B_BQKV:_B_BQKV + 1, :]                        # (1, 96)
    w1 = b_ref[_B_W1:_B_W1 + HID, 0:MLP]                        # (32, 64)
    b1 = b_ref[_B_B1:_B_B1 + 1, 0:MLP]                          # (1, 64)
    whead = b_ref[_B_WHD:_B_WHD + HID, :]                       # (32, 96) zero-padded
    bhead = b_ref[_B_BHD:_B_BHD + 1, :]                         # (1, 96)
    wb2 = b_ref[_B_WB2:_B_WB2 + HID, 0:4]                       # (32, 4)
    box_bias = b_ref[_B_BB:_B_BB + NPATCH, 0:4]                 # (16, 4) bb2 folded

    # ---- patch embedding: im2col patches @ W + (pos + patch_b) ----
    x = (jnp.dot(patches_ref[...], patch_w,
                 preferred_element_type=jnp.float32) + pos)     # (N, D)

    # ---- ViT encoder layer: LN -> attention -> residual -> LN -> MLP ----
    h = _layernorm(x, ln1_g, ln1_b)
    qkv = jnp.dot(h, wqkv, preferred_element_type=jnp.float32) + bqkv   # (N, 3D)
    q = qkv[:, 0:HID]
    k = qkv[:, HID:2 * HID]
    v = qkv[:, 2 * HID:3 * HID]
    # q @ k^T without an explicit transpose (contract last dims of both)
    s = lax.dot_general(q, k, (((1,), (1,)), ((), ())),
                        preferred_element_type=jnp.float32) * (HID ** -0.5)
    s = s - jnp.max(s, axis=-1, keepdims=True)
    p = jnp.exp(s)
    p = p * pl.reciprocal(jnp.sum(p, axis=-1, keepdims=True), approx=True)
    attn = jnp.dot(p, v, preferred_element_type=jnp.float32)
    attn = jnp.dot(attn, wo, preferred_element_type=jnp.float32) + bo
    x = x + attn

    h2 = _layernorm(x, ln2_g, ln2_b)
    m = jnp.dot(h2, w1, preferred_element_type=jnp.float32) + b1
    m = jax.nn.gelu(m, approximate=True)
    m = jnp.dot(m, w2, preferred_element_type=jnp.float32) + b2
    x = x + m

    # ---- detection heads ----
    img = _layernorm(x, lnf_g, lnf_b)                           # (N, D)

    # fused class-embed / box-MLP-0 / shift / scale matmul (lane-aligned slab)
    ha = jnp.dot(img, whead, preferred_element_type=jnp.float32) + bhead   # (N, 96)
    ice = ha[:, 0:HID]
    b0 = ha[:, HID:2 * HID]
    shift = ha[:, 2 * HID:2 * HID + 1]
    scale_pre = ha[:, 2 * HID + 1:2 * HID + 2]

    # class head (OWLv2 style: cosine sim + shift/scale)
    ice_n = ice * jax.lax.rsqrt(jnp.sum(ice * ice, axis=-1, keepdims=True) + 1e-6)
    txt_n = txt * jax.lax.rsqrt(jnp.sum(txt * txt, axis=-1, keepdims=True) + 1e-6)
    logits = lax.dot_general(ice_n, txt_n, (((1,), (1,)), ((), ())),
                             preferred_element_type=jnp.float32)          # (N, Q)
    # elu(scale_pre) + 1 (clamp exp arg so the unselected branch stays finite)
    scale = jnp.where(scale_pre > 0.0, scale_pre,
                      jnp.exp(jnp.minimum(scale_pre, 0.0)) - 1.0) + 1.0
    logits = (logits + shift) * scale

    # box head: 3-layer GELU MLP + box bias + sigmoid
    hb = jax.nn.gelu(b0, approximate=True)
    hb = jax.nn.gelu(jnp.dot(hb, wb1, preferred_element_type=jnp.float32) + bb1,
                     approximate=True)
    hb = jnp.dot(hb, wb2, preferred_element_type=jnp.float32) + box_bias
    boxes = jax.nn.sigmoid(hb)                                  # (N, 4)

    # ---- fused post-processing (torch.max / sigmoid / argmax / box select) ----
    max_l = jnp.max(logits, axis=-1, keepdims=True)             # (N, 1)
    scores = jax.nn.sigmoid(max_l)                              # (N, 1)
    q_iota = lax.broadcasted_iota(jnp.int32, (NPATCH, NQ), 1).astype(jnp.float32)
    labels = jnp.min(jnp.where(logits >= max_l, q_iota, float(NQ)),
                     axis=-1, keepdims=True)                    # (N, 1) first argmax

    p_iota = lax.broadcasted_iota(jnp.int32, (NPATCH, 1), 0).astype(jnp.float32)
    best_s = jnp.max(scores, axis=0, keepdims=True)             # (1, 1)
    best_idx = jnp.min(jnp.where(scores >= best_s, p_iota, float(NPATCH)),
                       axis=0, keepdims=True)                   # (1, 1) first argmax
    sel = p_iota == best_idx                                    # (N, 1) one-hot
    best_box = jnp.sum(jnp.where(sel, boxes, 0.0), axis=0, keepdims=True)  # (1, 4)
    point = jnp.concatenate(
        [best_box[:, 0:1], best_box[:, 1:2] + 0.5 * best_box[:, 3:4]], axis=-1)  # (1,2)

    # ---- single in-register pack + one unmasked lane-dense (N, 128) store ----
    point_rows = jnp.broadcast_to(point, (NPATCH, 2))
    best_rows = jnp.broadcast_to(best_idx, (NPATCH, 1))
    pad = jnp.zeros((NPATCH, OUT_LANES - _N_USED), jnp.float32)
    out_ref[...] = jnp.concatenate(
        [logits, boxes, scores, labels, point_rows, best_rows, pad], axis=-1)


def _owlv2_call(patches, slab_a, slab_b):
    vmem = pltpu.MemorySpace.VMEM
    return pl.pallas_call(
        _owlv2_kernel,
        out_shape=jax.ShapeDtypeStruct((NPATCH, OUT_LANES), jnp.float32),
        in_specs=[pl.BlockSpec(memory_space=vmem)] * 3,
        out_specs=pl.BlockSpec(memory_space=vmem),
    )(patches, slab_a, slab_b)


# --------------------------------------------------------------------------
# parameters / packing / glue
# --------------------------------------------------------------------------
def init_params(key):
    keys = jax.random.split(key, 16)

    def w(i, shape, scale=0.02):
        return scale * jax.random.normal(keys[i], shape, dtype=jnp.float32)

    z = lambda *s: jnp.zeros(s, jnp.float32)
    o = lambda *s: jnp.ones(s, jnp.float32)
    return dict(
        patch_w=w(0, (CH * PATCH * PATCH, HID)), patch_b=z(1, HID),
        pos=w(1, (NPATCH, HID)),
        ln1_g=o(1, HID), ln1_b=z(1, HID),
        wq=w(2, (HID, HID)), bq=z(1, HID),
        wk=w(3, (HID, HID)), bk=z(1, HID),
        wv=w(4, (HID, HID)), bv=z(1, HID),
        wo=w(5, (HID, HID)), bo=z(1, HID),
        ln2_g=o(1, HID), ln2_b=z(1, HID),
        w1=w(6, (HID, MLP)), b1=z(1, MLP),
        w2=w(7, (MLP, HID)), b2=z(1, HID),
        lnf_g=o(1, HID), lnf_b=z(1, HID),
        wc=w(8, (HID, HID)), bc=z(1, HID),
        wsh=w(9, (HID, 1)), bsh=z(1, 1),
        wsc=w(10, (HID, 1)), bsc=z(1, 1),
        wb0=w(11, (HID, HID)), bb0=z(1, HID),
        wb1=w(12, (HID, HID)), bb1=z(1, HID),
        wb2=w(13, (HID, 4)), bb2=z(1, 4),
        text_embeds=w(14, (NQ, HID), scale=1.0),
    )


def compute_box_bias():
    coords = (jnp.arange(NSIDE, dtype=jnp.float32) + 0.5) / NSIDE
    yy, xx = jnp.meshgrid(coords, coords, indexing="ij")
    xy = jnp.stack([xx.reshape(-1), yy.reshape(-1)], axis=-1)   # (N, 2)
    xy = jnp.clip(xy, 1e-4, 1.0 - 1e-4)
    xy_bias = jnp.log(xy) - jnp.log1p(-xy)
    wh = jnp.full((NPATCH, 2), 1.0 / NSIDE, dtype=jnp.float32)
    wh_bias = jnp.log(wh) - jnp.log1p(-wh)
    return jnp.concatenate([xy_bias, wh_bias], axis=-1)         # (N, 4)


def pack_params(p):
    """Concatenate all parameters into two lane-dense VMEM slabs (done once)."""
    def pad_rows(x, rows):
        return jnp.pad(x, ((0, rows - x.shape[0]), (0, 0)))

    def pad_lanes(x, lanes):
        return jnp.pad(x, ((0, 0), (0, lanes - x.shape[1])))

    slab_a = jnp.concatenate([
        p["patch_w"],                                                     # 0:768
        p["pos"] + p["patch_b"],                                          # 768:784
        pad_rows(jnp.concatenate([p["ln1_g"], p["ln1_b"], p["ln2_g"],
                                  p["ln2_b"], p["lnf_g"], p["lnf_b"]], 0), 8),  # 784:792
        pad_rows(jnp.concatenate([p["bo"], p["b2"], p["bb1"]], 0), 8),    # 792:800
        p["wo"],                                                          # 800:832
        p["w2"],                                                          # 832:896
        p["wb1"],                                                         # 896:928
        pad_rows(p["text_embeds"], 8),                                    # 928:936
    ], axis=0)
    assert slab_a.shape == (_A_ROWS, HID)

    whead = jnp.concatenate([p["wc"], p["wb0"], p["wsh"], p["wsc"]], axis=1)  # (32, 66)
    bhead = jnp.concatenate([p["bc"], p["bb0"], p["bsh"], p["bsc"]], axis=1)  # (1, 66)
    slab_b = jnp.concatenate([
        jnp.concatenate([p["wq"], p["wk"], p["wv"]], axis=1),             # 0:32
        pad_rows(jnp.concatenate([p["bq"], p["bk"], p["bv"]], axis=1), 8),  # 32:40
        pad_lanes(p["w1"], _B_LANES),                                     # 40:72
        pad_rows(pad_lanes(p["b1"], _B_LANES), 8),                        # 72:80
        pad_lanes(whead, _B_LANES),                                       # 80:112
        pad_rows(pad_lanes(bhead, _B_LANES), 8),                          # 112:120
        pad_lanes(p["wb2"], _B_LANES),                                    # 120:152
        pad_lanes(compute_box_bias() + p["bb2"], _B_LANES),               # 152:168
    ], axis=0)
    assert slab_b.shape == (_B_ROWS, _B_LANES)

    return dict(slab_a=slab_a, slab_b=slab_b)


def extract_patches(image):
    # One-time host-side preprocessing (Owlv2Processor equivalent):
    # image (1, C, H, W) NCHW -> (NPATCH, C*P*P)  (Conv2d k=P,s=P im2col layout).
    # Kept OFF the jitted hot path so the transpose is not a per-call dispatch.
    x = image[0].reshape(CH, NSIDE, PATCH, NSIDE, PATCH)
    x = x.transpose(1, 3, 0, 2, 4)                  # (n, n, C, P, P)
    return x.reshape(NPATCH, CH * PATCH * PATCH)


@jax.jit
def owlv2_forward(patches, slab_a, slab_b):
    packed = _owlv2_call(patches, slab_a, slab_b)
    # Only trivial slices remain outside the kernel; argmaxes / box selection /
    # point arithmetic were computed inside the Pallas kernel.
    scores = packed[:, _L_SCR]                       # sigmoid(max(logits, -1).values)
    labels = packed[:, _L_LBL].astype(jnp.int32)     # max(...).indices
    boxes = packed[:, _L_BOX:_L_BOX + 4]             # (N, 4) cx, cy, w, h
    cx = packed[0, _L_PT]
    cy_bottom = packed[0, _L_PT + 1]                 # cy + h/2
    return (cx, cy_bottom), scores, labels, boxes


if __name__ == "__main__":
    key = jax.random.PRNGKey(0)
    pkey, ikey = jax.random.split(key)
    params = init_params(pkey)
    slabs = pack_params(params)

    image = jax.random.uniform(ikey, (1, CH, IMG, IMG), dtype=jnp.float32)
    patches = extract_patches(image)     # preprocessing, outside the jitted hot path

    (cx, cy_bottom), scores, labels, boxes = owlv2_forward(
        patches, slabs["slab_a"], slabs["slab_b"])
    jax.block_until_ready((cx, cy_bottom, scores, labels, boxes))
    print("KERNEL_OK")
</pallas_src>

<mosaic_0001>
module attributes {stable_mosaic.version = 11 : i64} {
  func.func @_owlv2_kernel(%arg0: memref<16x768xf32, #tpu.memory_space<vmem>>, %arg1: memref<936x32xf32, #tpu.memory_space<vmem>>, %arg2: memref<168x96xf32, #tpu.memory_space<vmem>>, %arg3: memref<16x128xf32, #tpu.memory_space<vmem>>) attributes {dimension_semantics = [], scalar_prefetch = 0 : i64, scratch_operands = 0 : i64, tpu.core_type = #tpu.core_type<tc>} {
    %c0 = arith.constant 0 : index
    %c0_0 = arith.constant 0 : index
    %0 = vector.load %arg1[%c0, %c0_0] : memref<936x32xf32, #tpu.memory_space<vmem>>, vector<768x32xf32>
    %c768 = arith.constant 768 : index
    %c0_1 = arith.constant 0 : index
    %1 = vector.load %arg1[%c768, %c0_1] : memref<936x32xf32, #tpu.memory_space<vmem>>, vector<16x32xf32>
    %c784 = arith.constant 784 : index
    %c0_2 = arith.constant 0 : index
    %2 = vector.load %arg1[%c784, %c0_2] : memref<936x32xf32, #tpu.memory_space<vmem>>, vector<1x32xf32>
    %c785 = arith.constant 785 : index
    %c0_3 = arith.constant 0 : index
    %3 = vector.load %arg1[%c785, %c0_3] : memref<936x32xf32, #tpu.memory_space<vmem>>, vector<1x32xf32>
    %c786 = arith.constant 786 : index
    %c0_4 = arith.constant 0 : index
    %4 = vector.load %arg1[%c786, %c0_4] : memref<936x32xf32, #tpu.memory_space<vmem>>, vector<1x32xf32>
    %c787 = arith.constant 787 : index
    %c0_5 = arith.constant 0 : index
    %5 = vector.load %arg1[%c787, %c0_5] : memref<936x32xf32, #tpu.memory_space<vmem>>, vector<1x32xf32>
    %c788 = arith.constant 788 : index
    %c0_6 = arith.constant 0 : index
    %6 = vector.load %arg1[%c788, %c0_6] : memref<936x32xf32, #tpu.memory_space<vmem>>, vector<1x32xf32>
    %c789 = arith.constant 789 : index
    %c0_7 = arith.constant 0 : index
    %7 = vector.load %arg1[%c789, %c0_7] : memref<936x32xf32, #tpu.memory_space<vmem>>, vector<1x32xf32>
    %c792 = arith.constant 792 : index
    %c0_8 = arith.constant 0 : index
    %8 = vector.load %arg1[%c792, %c0_8] : memref<936x32xf32, #tpu.memory_space<vmem>>, vector<1x32xf32>
    %c793 = arith.constant 793 : index
    %c0_9 = arith.constant 0 : index
    %9 = vector.load %arg1[%c793, %c0_9] : memref<936x32xf32, #tpu.memory_space<vmem>>, vector<1x32xf32>
    %c794 = arith.constant 794 : index
    %c0_10 = arith.constant 0 : index
    %10 = vector.load %arg1[%c794, %c0_10] : memref<936x32xf32, #tpu.memory_space<vmem>>, vector<1x32xf32>
    %c800 = arith.constant 800 : index
    %c0_11 = arith.constant 0 : index
    %11 = vector.load %arg1[%c800, %c0_11] : memref<936x32xf32, #tpu.memory_space<vmem>>, vector<32x32xf32>
    %c832 = arith.constant 832 : index
    %c0_12 = arith.constant 0 : index
    %12 = vector.load %arg1[%c832, %c0_12] : memref<936x32xf32, #tpu.memory_space<vmem>>, vector<64x32xf32>
    %c896 = arith.constant 896 : index
    %c0_13 = arith.constant 0 : index
    %13 = vector.load %arg1[%c896, %c0_13] : memref<936x32xf32, #tpu.memory_space<vmem>>, vector<32x32xf32>
    %c928 = arith.constant 928 : index
    %c0_14 = arith.constant 0 : index
    %14 = vector.load %arg1[%c928, %c0_14] : memref<936x32xf32, #tpu.memory_space<vmem>>, vector<4x32xf32>
    %c0_15 = arith.constant 0 : index
    %c0_16 = arith.constant 0 : index
    %15 = vector.load %arg2[%c0_15, %c0_16] : memref<168x96xf32, #tpu.memory_space<vmem>>, vector<32x96xf32>
    %c32 = arith.constant 32 : index
    %c0_17 = arith.constant 0 : index
    %16 = vector.load %arg2[%c32, %c0_17] : memref<168x96xf32, #tpu.memory_space<vmem>>, vector<1x96xf32>
    %c40 = arith.constant 40 : index
    %c0_18 = arith.constant 0 : index
    %17 = vector.load %arg2[%c40, %c0_18] : memref<168x96xf32, #tpu.memory_space<vmem>>, vector<32x64xf32>
    %c72 = arith.constant 72 : index
    %c0_19 = arith.constant 0 : index
    %18 = vector.load %arg2[%c72, %c0_19] : memref<168x96xf32, #tpu.memory_space<vmem>>, vector<1x64xf32>
    %c80 = arith.constant 80 : index
    %c0_20 = arith.constant 0 : index
    %19 = vector.load %arg2[%c80, %c0_20] : memref<168x96xf32, #tpu.memory_space<vmem>>, vector<32x96xf32>
    %c112 = arith.constant 112 : index
    %c0_21 = arith.constant 0 : index
    %20 = vector.load %arg2[%c112, %c0_21] : memref<168x96xf32, #tpu.memory_space<vmem>>, vector<1x96xf32>
    %c120 = arith.constant 120 : index
    %c0_22 = arith.constant 0 : index
    %21 = vector.load %arg2[%c120, %c0_22] : memref<168x96xf32, #tpu.memory_space<vmem>>, vector<32x4xf32>
    %c152 = arith.constant 152 : index
    %c0_23 = arith.constant 0 : index
    %22 = vector.load %arg2[%c152, %c0_23] : memref<168x96xf32, #tpu.memory_space<vmem>>, vector<16x4xf32>
    %c0_24 = arith.constant 0 : index
    %c0_25 = arith.constant 0 : index
    %23 = vector.load %arg0[%c0_24, %c0_25] : memref<16x768xf32, #tpu.memory_space<vmem>>, vector<16x768xf32>
    %cst = arith.constant dense<0.000000e+00> : vector<16x32xf32>
    %24 = tpu.matmul %23, %0, %cst {dimension_numbers = #tpu.dot_dimension_numbers<[1], [0], [0], [1], [0, 0, 1, 1], [], []>} : vector<16x768xf32>, vector<768x32xf32>, vector<16x32xf32> -> vector<16x32xf32>
    %25 = arith.addf %24, %1 : vector<16x32xf32>
    %cst_26 = arith.constant dense<0.000000e+00> : vector<16xf32>
    %26 = vector.multi_reduction <add>, %25, %cst_26 [1] : vector<16x32xf32> to vector<16xf32>
    %27 = vector.shape_cast %26 : vector<16xf32> to vector<16x1xf32>
    %cst_27 = arith.constant 3.200000e+01 : f32
    %28 = vector.broadcast %cst_27 : f32 to vector<16x1xf32>
    %29 = arith.divf %27, %28 : vector<16x1xf32>
    %30 = vector.broadcast %29 : vector<16x1xf32> to vector<16x32xf32>
    %31 = arith.subf %25, %30 : vector<16x32xf32>
    %32 = arith.mulf %31, %31 : vector<16x32xf32>
    %cst_28 = arith.constant dense<0.000000e+00> : vector<16xf32>
    %33 = vector.multi_reduction <add>, %32, %cst_28 [1] : vector<16x32xf32> to vector<16xf32>
    %34 = vector.shape_cast %33 : vector<16xf32> to vector<16x1xf32>
    %cst_29 = arith.constant 3.200000e+01 : f32
    %35 = vector.broadcast %cst_29 : f32 to vector<16x1xf32>
    %36 = arith.divf %34, %35 : vector<16x1xf32>
    %37 = vector.broadcast %29 : vector<16x1xf32> to vector<16x32xf32>
    %38 = arith.subf %25, %37 : vector<16x32xf32>
    %cst_30 = arith.constant 9.99999974E-6 : f32
    %39 = vector.broadcast %cst_30 : f32 to vector<16x1xf32>
    %40 = arith.addf %36, %39 : vector<16x1xf32>
    %41 = math.rsqrt %40 : vector<16x1xf32>
    %42 = vector.broadcast %41 : vector<16x1xf32> to vector<16x32xf32>
    %43 = arith.mulf %38, %42 : vector<16x32xf32>
    %44 = vector.broadcast %2 : vector<1x32xf32> to vector<16x32xf32>
    %45 = arith.mulf %43, %44 : vector<16x32xf32>
    %46 = vector.broadcast %3 : vector<1x32xf32> to vector<16x32xf32>
    %47 = arith.addf %45, %46 : vector<16x32xf32>
    %cst_31 = arith.constant dense<0.000000e+00> : vector<16x96xf32>
    %48 = tpu.matmul %47, %15, %cst_31 {dimension_numbers = #tpu.dot_dimension_numbers<[1], [0], [0], [1], [0, 0, 1, 1], [], []>} : vector<16x32xf32>, vector<32x96xf32>, vector<16x96xf32> -> vector<16x96xf32>
    %49 = vector.broadcast %16 : vector<1x96xf32> to vector<16x96xf32>
    %50 = arith.addf %48, %49 : vector<16x96xf32>
    %51 = vector.extract_strided_slice %50 {offsets = [0, 0], sizes = [16, 32], strides = [1, 1]} : vector<16x96xf32> to vector<16x32xf32>
    %52 = vector.extract_strided_slice %50 {offsets = [0, 32], sizes = [16, 32], strides = [1, 1]} : vector<16x96xf32> to vector<16x32xf32>
    %53 = vector.extract_strided_slice %50 {offsets = [0, 64], sizes = [16, 32], strides = [1, 1]} : vector<16x96xf32> to vector<16x32xf32>
    %cst_32 = arith.constant dense<0.000000e+00> : vector<16x16xf32>
    %54 = tpu.matmul %51, %52, %cst_32 {dimension_numbers = #tpu.dot_dimension_numbers<[1], [1], [0], [0], [0, 0, 1, 0], [], []>} : vector<16x32xf32>, vector<16x32xf32>, vector<16x16xf32> -> vector<16x16xf32>
    %cst_33 = arith.constant 0.176776692 : f32
    %55 = vector.broadcast %cst_33 : f32 to vector<16x16xf32>
    %56 = arith.mulf %54, %55 : vector<16x16xf32>
    %cst_34 = arith.constant dense<0xFF800000> : vector<16xf32>
    %57 = vector.multi_reduction <maximumf>, %56, %cst_34 [1] : vector<16x16xf32> to vector<16xf32>
    %58 = vector.shape_cast %57 : vector<16xf32> to vector<16x1xf32>
    %59 = vector.broadcast %58 : vector<16x1xf32> to vector<16x16xf32>
    %60 = arith.subf %56, %59 : vector<16x16xf32>
    %61 = math.exp %60 : vector<16x16xf32>
    %cst_35 = arith.constant dense<0.000000e+00> : vector<16xf32>
    %62 = vector.multi_reduction <add>, %61, %cst_35 [1] : vector<16x16xf32> to vector<16xf32>
    %63 = vector.shape_cast %62 : vector<16xf32> to vector<16x1xf32>
    %64 = tpu.reciprocal %63 {approx = true} : vector<16x1xf32> -> vector<16x1xf32>
    %65 = vector.broadcast %64 : vector<16x1xf32> to vector<16x16xf32>
    %66 = arith.mulf %61, %65 : vector<16x16xf32>
    %cst_36 = arith.constant dense<0.000000e+00> : vector<16x32xf32>
    %67 = tpu.matmul %66, %53, %cst_36 {dimension_numbers = #tpu.dot_dimension_numbers<[1], [0], [0], [1], [0, 0, 1, 1], [], []>} : vector<16x16xf32>, vector<16x32xf32>, vector<16x32xf32> -> vector<16x32xf32>
    %cst_37 = arith.constant dense<0.000000e+00> : vector<16x32xf32>
    %68 = tpu.matmul %67, %11, %cst_37 {dimension_numbers = #tpu.dot_dimension_numbers<[1], [0], [0], [1], [0, 0, 1, 1], [], []>} : vector<16x32xf32>, vector<32x32xf32>, vector<16x32xf32> -> vector<16x32xf32>
    %69 = vector.broadcast %8 : vector<1x32xf32> to vector<16x32xf32>
    %70 = arith.addf %68, %69 : vector<16x32xf32>
    %71 = arith.addf %25, %70 : vector<16x32xf32>
    %cst_38 = arith.constant dense<0.000000e+00> : vector<16xf32>
    %72 = vector.multi_reduction <add>, %71, %cst_38 [1] : vector<16x32xf32> to vector<16xf32>
    %73 = vector.shape_cast %72 : vector<16xf32> to vector<16x1xf32>
    %cst_39 = arith.constant 3.200000e+01 : f32
    %74 = vector.broadcast %cst_39 : f32 to vector<16x1xf32>
    %75 = arith.divf %73, %74 : vector<16x1xf32>
    %76 = vector.broadcast %75 : vector<16x1xf32> to vector<16x32xf32>
    %77 = arith.subf %71, %76 : vector<16x32xf32>
    %78 = arith.mulf %77, %77 : vector<16x32xf32>
    %cst_40 = arith.constant dense<0.000000e+00> : vector<16xf32>
    %79 = vector.multi_reduction <add>, %78, %cst_40 [1] : vector<16x32xf32> to vector<16xf32>
    %80 = vector.shape_cast %79 : vector<16xf32> to vector<16x1xf32>
    %cst_41 = arith.constant 3.200000e+01 : f32
    %81 = vector.broadcast %cst_41 : f32 to vector<16x1xf32>
    %82 = arith.divf %80, %81 : vector<16x1xf32>
    %83 = vector.broadcast %75 : vector<16x1xf32> to vector<16x32xf32>
    %84 = arith.subf %71, %83 : vector<16x32xf32>
    %cst_42 = arith.constant 9.99999974E-6 : f32
    %85 = vector.broadcast %cst_42 : f32 to vector<16x1xf32>
    %86 = arith.addf %82, %85 : vector<16x1xf32>
    %87 = math.rsqrt %86 : vector<16x1xf32>
    %88 = vector.broadcast %87 : vector<16x1xf32> to vector<16x32xf32>
    %89 = arith.mulf %84, %88 : vector<16x32xf32>
    %90 = vector.broadcast %4 : vector<1x32xf32> to vector<16x32xf32>
    %91 = arith.mulf %89, %90 : vector<16x32xf32>
    %92 = vector.broadcast %5 : vector<1x32xf32> to vector<16x32xf32>
    %93 = arith.addf %91, %92 : vector<16x32xf32>
    %cst_43 = arith.constant dense<0.000000e+00> : vector<16x64xf32>
    %94 = tpu.matmul %93, %17, %cst_43 {dimension_numbers = #tpu.dot_dimension_numbers<[1], [0], [0], [1], [0, 0, 1, 1], [], []>} : vector<16x32xf32>, vector<32x64xf32>, vector<16x64xf32> -> vector<16x64xf32>
    %95 = vector.broadcast %18 : vector<1x64xf32> to vector<16x64xf32>
    %96 = arith.addf %94, %95 : vector<16x64xf32>
    %97 = arith.mulf %96, %96 : vector<16x64xf32>
    %98 = arith.mulf %96, %97 : vector<16x64xf32>
    %cst_44 = arith.constant 4.471500e-02 : f32
    %99 = vector.broadcast %cst_44 : f32 to vector<16x64xf32>
    %100 = arith.mulf %99, %98 : vector<16x64xf32>
    %101 = arith.addf %96, %100 : vector<16x64xf32>
    %cst_45 = arith.constant 0.797884583 : f32
    %102 = vector.broadcast %cst_45 : f32 to vector<16x64xf32>
    %103 = arith.mulf %102, %101 : vector<16x64xf32>
    %104 = math.tanh %103 : vector<16x64xf32>
    %cst_46 = arith.constant 1.000000e+00 : f32
    %105 = vector.broadcast %cst_46 : f32 to vector<16x64xf32>
    %106 = arith.addf %105, %104 : vector<16x64xf32>
    %cst_47 = arith.constant 5.000000e-01 : f32
    %107 = vector.broadcast %cst_47 : f32 to vector<16x64xf32>
    %108 = arith.mulf %107, %106 : vector<16x64xf32>
    %109 = arith.mulf %96, %108 : vector<16x64xf32>
    %cst_48 = arith.constant dense<0.000000e+00> : vector<16x32xf32>
    %110 = tpu.matmul %109, %12, %cst_48 {dimension_numbers = #tpu.dot_dimension_numbers<[1], [0], [0], [1], [0, 0, 1, 1], [], []>} : vector<16x64xf32>, vector<64x32xf32>, vector<16x32xf32> -> vector<16x32xf32>
    %111 = vector.broadcast %9 : vector<1x32xf32> to vector<16x32xf32>
    %112 = arith.addf %110, %111 : vector<16x32xf32>
    %113 = arith.addf %71, %112 : vector<16x32xf32>
    %cst_49 = arith.constant dense<0.000000e+00> : vector<16xf32>
    %114 = vector.multi_reduction <add>, %113, %cst_49 [1] : vector<16x32xf32> to vector<16xf32>
    %115 = vector.shape_cast %114 : vector<16xf32> to vector<16x1xf32>
    %cst_50 = arith.constant 3.200000e+01 : f32
    %116 = vector.broadcast %cst_50 : f32 to vector<16x1xf32>
    %117 = arith.divf %115, %116 : vector<16x1xf32>
    %118 = vector.broadcast %117 : vector<16x1xf32> to vector<16x32xf32>
    %119 = arith.subf %113, %118 : vector<16x32xf32>
    %120 = arith.mulf %119, %119 : vector<16x32xf32>
    %cst_51 = arith.constant dense<0.000000e+00> : vector<16xf32>
    %121 = vector.multi_reduction <add>, %120, %cst_51 [1] : vector<16x32xf32> to vector<16xf32>
    %122 = vector.shape_cast %121 : vector<16xf32> to vector<16x1xf32>
    %cst_52 = arith.constant 3.200000e+01 : f32
    %123 = vector.broadcast %cst_52 : f32 to vector<16x1xf32>
    %124 = arith.divf %122, %123 : vector<16x1xf32>
    %125 = vector.broadcast %117 : vector<16x1xf32> to vector<16x32xf32>
    %126 = arith.subf %113, %125 : vector<16x32xf32>
    %cst_53 = arith.constant 9.99999974E-6 : f32
    %127 = vector.broadcast %cst_53 : f32 to vector<16x1xf32>
    %128 = arith.addf %124, %127 : vector<16x1xf32>
    %129 = math.rsqrt %128 : vector<16x1xf32>
    %130 = vector.broadcast %129 : vector<16x1xf32> to vector<16x32xf32>
    %131 = arith.mulf %126, %130 : vector<16x32xf32>
    %132 = vector.broadcast %6 : vector<1x32xf32> to vector<16x32xf32>
    %133 = arith.mulf %131, %132 : vector<16x32xf32>
    %134 = vector.broadcast %7 : vector<1x32xf32> to vector<16x32xf32>
    %135 = arith.addf %133, %134 : vector<16x32xf32>
    %cst_54 = arith.constant dense<0.000000e+00> : vector<16x96xf32>
    %136 = tpu.matmul %135, %19, %cst_54 {dimension_numbers = #tpu.dot_dimension_numbers<[1], [0], [0], [1], [0, 0, 1, 1], [], []>} : vector<16x32xf32>, vector<32x96xf32>, vector<16x96xf32> -> vector<16x96xf32>
    %137 = vector.broadcast %20 : vector<1x96xf32> to vector<16x96xf32>
    %138 = arith.addf %136, %137 : vector<16x96xf32>
    %139 = vector.extract_strided_slice %138 {offsets = [0, 0], sizes = [16, 32], strides = [1, 1]} : vector<16x96xf32> to vector<16x32xf32>
    %140 = vector.extract_strided_slice %138 {offsets = [0, 32], sizes = [16, 32], strides = [1, 1]} : vector<16x96xf32> to vector<16x32xf32>
    %141 = vector.extract_strided_slice %138 {offsets = [0, 64], sizes = [16, 1], strides = [1, 1]} : vector<16x96xf32> to vector<16x1xf32>
    %142 = vector.extract_strided_slice %138 {offsets = [0, 65], sizes = [16, 1], strides = [1, 1]} : vector<16x96xf32> to vector<16x1xf32>
    %143 = arith.mulf %139, %139 : vector<16x32xf32>
    %cst_55 = arith.constant dense<0.000000e+00> : vector<16xf32>
    %144 = vector.multi_reduction <add>, %143, %cst_55 [1] : vector<16x32xf32> to vector<16xf32>
    %145 = vector.shape_cast %144 : vector<16xf32> to vector<16x1xf32>
    %cst_56 = arith.constant 9.99999997E-7 : f32
    %146 = vector.broadcast %cst_56 : f32 to vector<16x1xf32>
    %147 = arith.addf %145, %146 : vector<16x1xf32>
    %148 = math.rsqrt %147 : vector<16x1xf32>
    %149 = vector.broadcast %148 : vector<16x1xf32> to vector<16x32xf32>
    %150 = arith.mulf %139, %149 : vector<16x32xf32>
    %151 = arith.mulf %14, %14 : vector<4x32xf32>
    %cst_57 = arith.constant dense<0.000000e+00> : vector<4xf32>
    %152 = vector.multi_reduction <add>, %151, %cst_57 [1] : vector<4x32xf32> to vector<4xf32>
    %153 = vector.shape_cast %152 : vector<4xf32> to vector<4x1xf32>
    %cst_58 = arith.constant 9.99999997E-7 : f32
    %154 = vector.broadcast %cst_58 : f32 to vector<4x1xf32>
    %155 = arith.addf %153, %154 : vector<4x1xf32>
    %156 = math.rsqrt %155 : vector<4x1xf32>
    %157 = vector.broadcast %156 : vector<4x1xf32> to vector<4x32xf32>
    %158 = arith.mulf %14, %157 : vector<4x32xf32>
    %cst_59 = arith.constant dense<0.000000e+00> : vector<16x4xf32>
    %159 = tpu.matmul %150, %158, %cst_59 {dimension_numbers = #tpu.dot_dimension_numbers<[1], [1], [0], [0], [0, 0, 1, 0], [], []>} : vector<16x32xf32>, vector<4x32xf32>, vector<16x4xf32> -> vector<16x4xf32>
    %cst_60 = arith.constant 0.000000e+00 : f32
    %160 = vector.broadcast %cst_60 : f32 to vector<16x1xf32>
    %161 = arith.cmpf ogt, %142, %160 : vector<16x1xf32>
    %cst_61 = arith.constant 0.000000e+00 : f32
    %162 = vector.broadcast %cst_61 : f32 to vector<16x1xf32>
    %163 = arith.minimumf %142, %162 : vector<16x1xf32>
    %164 = math.exp %163 : vector<16x1xf32>
    %cst_62 = arith.constant 1.000000e+00 : f32
    %165 = vector.broadcast %cst_62 : f32 to vector<16x1xf32>
    %166 = arith.subf %164, %165 : vector<16x1xf32>
    %167 = arith.select %161, %142, %166 : vector<16x1xi1>, vector<16x1xf32>
    %cst_63 = arith.constant 1.000000e+00 : f32
    %168 = vector.broadcast %cst_63 : f32 to vector<16x1xf32>
    %169 = arith.addf %167, %168 : vector<16x1xf32>
    %170 = vector.broadcast %141 : vector<16x1xf32> to vector<16x4xf32>
    %171 = arith.addf %159, %170 : vector<16x4xf32>
    %172 = vector.broadcast %169 : vector<16x1xf32> to vector<16x4xf32>
    %173 = arith.mulf %171, %172 : vector<16x4xf32>
    %174 = arith.mulf %140, %140 : vector<16x32xf32>
    %175 = arith.mulf %140, %174 : vector<16x32xf32>
    %cst_64 = arith.constant 4.471500e-02 : f32
    %176 = vector.broadcast %cst_64 : f32 to vector<16x32xf32>
    %177 = arith.mulf %176, %175 : vector<16x32xf32>
    %178 = arith.addf %140, %177 : vector<16x32xf32>
    %cst_65 = arith.constant 0.797884583 : f32
    %179 = vector.broadcast %cst_65 : f32 to vector<16x32xf32>
    %180 = arith.mulf %179, %178 : vector<16x32xf32>
    %181 = math.tanh %180 : vector<16x32xf32>
    %cst_66 = arith.constant 1.000000e+00 : f32
    %182 = vector.broadcast %cst_66 : f32 to vector<16x32xf32>
    %183 = arith.addf %182, %181 : vector<16x32xf32>
    %cst_67 = arith.constant 5.000000e-01 : f32
    %184 = vector.broadcast %cst_67 : f32 to vector<16x32xf32>
    %185 = arith.mulf %184, %183 : vector<16x32xf32>
    %186 = arith.mulf %140, %185 : vector<16x32xf32>
    %cst_68 = arith.constant dense<0.000000e+00> : vector<16x32xf32>
    %187 = tpu.matmul %186, %13, %cst_68 {dimension_numbers = #tpu.dot_dimension_numbers<[1], [0], [0], [1], [0, 0, 1, 1], [], []>} : vector<16x32xf32>, vector<32x32xf32>, vector<16x32xf32> -> vector<16x32xf32>
    %188 = vector.broadcast %10 : vector<1x32xf32> to vector<16x32xf32>
    %189 = arith.addf %187, %188 : vector<16x32xf32>
    %190 = arith.mulf %189, %189 : vector<16x32xf32>
    %191 = arith.mulf %189, %190 : vector<16x32xf32>
    %cst_69 = arith.constant 4.471500e-02 : f32
    %192 = vector.broadcast %cst_69 : f32 to vector<16x32xf32>
    %193 = arith.mulf %192, %191 : vector<16x32xf32>
    %194 = arith.addf %189, %193 : vector<16x32xf32>
    %cst_70 = arith.constant 0.797884583 : f32
    %195 = vector.broadcast %cst_70 : f32 to vector<16x32xf32>
    %196 = arith.mulf %195, %194 : vector<16x32xf32>
    %197 = math.tanh %196 : vector<16x32xf32>
    %cst_71 = arith.constant 1.000000e+00 : f32
    %198 = vector.broadcast %cst_71 : f32 to vector<16x32xf32>
    %199 = arith.addf %198, %197 : vector<16x32xf32>
    %cst_72 = arith.constant 5.000000e-01 : f32
    %200 = vector.broadcast %cst_72 : f32 to vector<16x32xf32>
    %201 = arith.mulf %200, %199 : vector<16x32xf32>
    %202 = arith.mulf %189, %201 : vector<16x32xf32>
    %cst_73 = arith.constant dense<0.000000e+00> : vector<16x4xf32>
    %203 = tpu.matmul %202, %21, %cst_73 {dimension_numbers = #tpu.dot_dimension_numbers<[1], [0], [0], [1], [0, 0, 1, 1], [], []>} : vector<16x32xf32>, vector<32x4xf32>, vector<16x4xf32> -> vector<16x4xf32>
    %204 = arith.addf %203, %22 : vector<16x4xf32>
    %205 = arith.negf %204 : vector<16x4xf32>
    %206 = math.exp %205 : vector<16x4xf32>
    %cst_74 = arith.constant 1.000000e+00 : f32
    %207 = vector.broadcast %cst_74 : f32 to vector<16x4xf32>
    %208 = arith.addf %207, %206 : vector<16x4xf32>
    %209 = arith.divf %207, %208 : vector<16x4xf32>
    %cst_75 = arith.constant dense<0xFF800000> : vector<16xf32>
    %210 = vector.multi_reduction <maximumf>, %173, %cst_75 [1] : vector<16x4xf32> to vector<16xf32>
    %211 = vector.shape_cast %210 : vector<16xf32> to vector<16x1xf32>
    %212 = arith.negf %211 : vector<16x1xf32>
    %213 = math.exp %212 : vector<16x1xf32>
    %cst_76 = arith.constant 1.000000e+00 : f32
    %214 = vector.broadcast %cst_76 : f32 to vector<16x1xf32>
    %215 = arith.addf %214, %213 : vector<16x1xf32>
    %216 = arith.divf %214, %215 : vector<16x1xf32>
    %217 = tpu.iota {dimensions = array<i32: 1>} : vector<16x4xi32>
    %218 = arith.sitofp %217 : vector<16x4xi32> to vector<16x4xf32>
    %219 = vector.broadcast %211 : vector<16x1xf32> to vector<16x4xf32>
    %220 = arith.cmpf oge, %173, %219 : vector<16x4xf32>
    %cst_77 = arith.constant 4.000000e+00 : f32
    %221 = vector.broadcast %cst_77 : f32 to vector<16x4xf32>
    %222 = arith.select %220, %218, %221 : vector<16x4xi1>, vector<16x4xf32>
    %cst_78 = arith.constant dense<0x7F800000> : vector<16xf32>
    %223 = vector.multi_reduction <minimumf>, %222, %cst_78 [1] : vector<16x4xf32> to vector<16xf32>
    %224 = vector.shape_cast %223 : vector<16xf32> to vector<16x1xf32>
    %225 = tpu.iota {dimensions = array<i32: 0>} : vector<16x1xi32>
    %226 = arith.sitofp %225 : vector<16x1xi32> to vector<16x1xf32>
    %cst_79 = arith.constant dense<0xFF800000> : vector<1xf32>
    %227 = vector.multi_reduction <maximumf>, %216, %cst_79 [0] : vector<16x1xf32> to vector<1xf32>
    %228 = vector.shape_cast %227 : vector<1xf32> to vector<1x1xf32>
    %229 = vector.broadcast %228 : vector<1x1xf32> to vector<16x1xf32>
    %230 = arith.cmpf oge, %216, %229 : vector<16x1xf32>
    %cst_80 = arith.constant 1.600000e+01 : f32
    %231 = vector.broadcast %cst_80 : f32 to vector<16x1xf32>
    %232 = arith.select %230, %226, %231 : vector<16x1xi1>, vector<16x1xf32>
    %cst_81 = arith.constant dense<0x7F800000> : vector<1xf32>
    %233 = vector.multi_reduction <minimumf>, %232, %cst_81 [0] : vector<16x1xf32> to vector<1xf32>
    %234 = vector.shape_cast %233 : vector<1xf32> to vector<1x1xf32>
    %235 = vector.broadcast %234 : vector<1x1xf32> to vector<16x1xf32>
    %236 = arith.cmpf oeq, %226, %235 : vector<16x1xf32>
    %cst_82 = arith.constant 0.000000e+00 : f32
    %237 = vector.shape_cast %236 : vector<16x1xi1> to vector<16x1xi1>
    %238 = vector.broadcast %237 : vector<16x1xi1> to vector<16x4xi1>
    %239 = vector.broadcast %cst_82 : f32 to vector<16x4xf32>
    %240 = arith.select %238, %209, %239 : vector<16x4xi1>, vector<16x4xf32>
    %cst_83 = arith.constant dense<0.000000e+00> : vector<4xf32>
    %241 = vector.multi_reduction <add>, %240, %cst_83 [0] : vector<16x4xf32> to vector<4xf32>
    %242 = vector.shape_cast %241 : vector<4xf32> to vector<1x4xf32>
    %243 = vector.extract_strided_slice %242 {offsets = [0, 0], sizes = [1, 1], strides = [1, 1]} : vector<1x4xf32> to vector<1x1xf32>
    %244 = vector.extract_strided_slice %242 {offsets = [0, 1], sizes = [1, 1], strides = [1, 1]} : vector<1x4xf32> to vector<1x1xf32>
    %245 = vector.extract_strided_slice %242 {offsets = [0, 3], sizes = [1, 1], strides = [1, 1]} : vector<1x4xf32> to vector<1x1xf32>
    %cst_84 = arith.constant 5.000000e-01 : f32
    %246 = vector.broadcast %cst_84 : f32 to vector<1x1xf32>
    %247 = arith.mulf %246, %245 : vector<1x1xf32>
    %248 = arith.addf %244, %247 : vector<1x1xf32>
    %249 = tpu.concatenate %243, %248 in 1 : vector<1x1xf32>, vector<1x1xf32> -> vector<1x2xf32>
    %250 = vector.shape_cast %249 : vector<1x2xf32> to vector<1x2xf32>
    %251 = vector.broadcast %250 : vector<1x2xf32> to vector<16x2xf32>
    %252 = vector.shape_cast %234 : vector<1x1xf32> to vector<1x1xf32>
    %253 = vector.broadcast %252 : vector<1x1xf32> to vector<16x1xf32>
    %cst_85 = arith.constant 0.000000e+00 : f32
    %254 = vector.broadcast %cst_85 : f32 to vector<16x115xf32>
    %255 = tpu.concatenate %173, %209, %216, %224, %251, %253, %254 in 1 : vector<16x4xf32>, vector<16x4xf32>, vector<16x1xf32>, vector<16x1xf32>, vector<16x2xf32>, vector<16x1xf32>, vector<16x115xf32> -> vector<16x128xf32>
    %c0_86 = arith.constant 0 : index
    %c0_87 = arith.constant 0 : index
    %256 = vector.load %arg3[%c0_86, %c0_87] : memref<16x128xf32, #tpu.memory_space<vmem>>, vector<16x128xf32>
    tpu.vector_store %arg3[%c0_86, %c0_87], %255 {strides = array<i32>} : memref<16x128xf32, #tpu.memory_space<vmem>>, vector<16x128xf32>,
    return
  }
}

</mosaic_0001>

<llo_original>
// kernel: owlv2_forward.1
$region0: #{owlv2_forward.1}
  #allocation0 [shape = 'u32[]', space=smem, size = 0x4, offset = 0x4, fixed_abs, tag = 'smem constant byte address 0x4 - core index']
  #allocation1 [shape = 'u32[144,128]{1,0:T(1,128)}', space=vmem, size = 0x12000, scoped, tag = 'internal scratch']
  %s0 = inlined_call_operand.vmem [shape: f32[16,768], index: 0, kind: input, shape index: {}]
  %s1 = inlined_call_operand.vmem [shape: f32[936,32], index: 1, kind: input, shape index: {}]
  %s2 = inlined_call_operand.vmem [shape: f32[168,96], index: 2, kind: input, shape index: {}]
  %s3 = inlined_call_operand.vmem [shape: f32[16,128], index: 3, kind: output, shape index: {}]
  %s4 = sld [smem:[#allocation0]]
  $region22: #{owlv2_forward.1} parent=0
    _
  %s6 = ssub.s32 1, %s4
  %s7 = scalar_select 0, %s6, %s4
  // Predicated region
  $region2: #{owlv2_forward.1} parent=0 // pred_check
    _
  $region3: #{owlv2_forward.1} parent=0 // pred_check_branch
    %9 = sbr.rel (0) target = $region5
  $region4: #{owlv2_forward.1} parent=0 // pred_region
    _
  $region5: #{owlv2_forward.1} parent=0 // pred_fallthru
    _
  // Predicated region
  $region6: #{owlv2_forward.1} parent=0 // pred_check
    _
  $region7: #{owlv2_forward.1} parent=0 // pred_check_branch
    %11 = sbr.rel (0) target = $region9
  $region8: #{owlv2_forward.1} parent=0 // pred_region
    _
  $region9: #{owlv2_forward.1} parent=0 // pred_fallthru
    _
  // Predicated region
  $region10: #{owlv2_forward.1} parent=0 // pred_check
    _
  $region11: #{owlv2_forward.1} parent=0 // pred_check_branch
    %13 = sbr.rel (0) target = $region13
  $region12: #{owlv2_forward.1} parent=0 // pred_region
    _
  $region13: #{owlv2_forward.1} parent=0 // pred_fallthru
    _
  %v14 = vld [vmem:[%s1] sm:$0xff]
  %v15 = vld [vmem:[%s1 + $0x8] sm:$0xff]
  %v16 = vld [vmem:[%s1 + $0x10] sm:$0xff]
  %v17 = vld [vmem:[%s1 + $0x18] sm:$0xff]
  %v18 = vld [vmem:[%s1 + $0x20] sm:$0xff]
  %v19 = vld [vmem:[%s1 + $0x28] sm:$0xff]
  %v20 = vld [vmem:[%s1 + $0x30] sm:$0xff]
  %v21 = vld [vmem:[%s1 + $0x38] sm:$0xff]
  %v22 = vld [vmem:[%s1 + $0x40] sm:$0xff]
  %v23 = vld [vmem:[%s1 + $0x48] sm:$0xff]
  %v24 = vld [vmem:[%s1 + $0x50] sm:$0xff]
  %v25 = vld [vmem:[%s1 + $0x58] sm:$0xff]
  %v26 = vld [vmem:[%s1 + $0x60] sm:$0xff]
  %v27 = vld [vmem:[%s1 + $0x68] sm:$0xff]
  %v28 = vld [vmem:[%s1 + $0x70] sm:$0xff]
  %v29 = vld [vmem:[%s1 + $0x78] sm:$0xff]
  %v30 = vld [vmem:[%s1 + $0x80] sm:$0xff]
  %v31 = vld [vmem:[%s1 + $0x88] sm:$0xff]
  %v32 = vld [vmem:[%s1 + $0x90] sm:$0xff]
  %v33 = vld [vmem:[%s1 + $0x98] sm:$0xff]
  %v34 = vld [vmem:[%s1 + $0xa0] sm:$0xff]
  %v35 = vld [vmem:[%s1 + $0xa8] sm:$0xff]
  %v36 = vld [vmem:[%s1 + $0xb0] sm:$0xff]
  %v37 = vld [vmem:[%s1 + $0xb8] sm:$0xff]
  %v38 = vld [vmem:[%s1 + $0xc0] sm:$0xff]
  %v39 = vld [vmem:[%s1 + $0xc8] sm:$0xff]
  %v40 = vld [vmem:[%s1 + $0xd0] sm:$0xff]
  %v41 = vld [vmem:[%s1 + $0xd8] sm:$0xff]
  %v42 = vld [vmem:[%s1 + $0xe0] sm:$0xff]
  %v43 = vld [vmem:[%s1 + $0xe8] sm:$0xff]
  %v44 = vld [vmem:[%s1 + $0xf0] sm:$0xff]
  %v45 = vld [vmem:[%s1 + $0xf8] sm:$0xff]
  %v46 = vld [vmem:[%s1 + $0x100] sm:$0xff]
  %v47 = vld [vmem:[%s1 + $0x108] sm:$0xff]
  %v48 = vld [vmem:[%s1 + $0x110] sm:$0xff]
  %v49 = vld [vmem:[%s1 + $0x118] sm:$0xff]
  %v50 = vld [vmem:[%s1 + $0x120] sm:$0xff]
  %v51 = vld [vmem:[%s1 + $0x128] sm:$0xff]
  %v52 = vld [vmem:[%s1 + $0x130] sm:$0xff]
  %v53 = vld [vmem:[%s1 + $0x138] sm:$0xff]
  %v54 = vld [vmem:[%s1 + $0x140] sm:$0xff]
  %v55 = vld [vmem:[%s1 + $0x148] sm:$0xff]
  %v56 = vld [vmem:[%s1 + $0x150] sm:$0xff]
  %v57 = vld [vmem:[%s1 + $0x158] sm:$0xff]
  %v58 = vld [vmem:[%s1 + $0x160] sm:$0xff]
  %v59 = vld [vmem:[%s1 + $0x168] sm:$0xff]
  %v60 = vld [vmem:[%s1 + $0x170] sm:$0xff]
  %v61 = vld [vmem:[%s1 + $0x178] sm:$0xff]
  %v62 = vld [vmem:[%s1 + $0x180] sm:$0xff]
  %v63 = vld [vmem:[%s1 + $0x188] sm:$0xff]
  %v64 = vld [vmem:[%s1 + $0x190] sm:$0xff]
  %v65 = vld [vmem:[%s1 + $0x198] sm:$0xff]
  %v66 = vld [vmem:[%s1 + $0x1a0] sm:$0xff]
  %v67 = vld [vmem:[%s1 + $0x1a8] sm:$0xff]
  %v68 = vld [vmem:[%s1 + $0x1b0] sm:$0xff]
  %v69 = vld [vmem:[%s1 + $0x1b8] sm:$0xff]
  %v70 = vld [vmem:[%s1 + $0x1c0] sm:$0xff]
  %v71 = vld [vmem:[%s1 + $0x1c8] sm:$0xff]
  %v72 = vld [vmem:[%s1 + $0x1d0] sm:$0xff]
  %v73 = vld [vmem:[%s1 + $0x1d8] sm:$0xff]
  %v74 = vld [vmem:[%s1 + $0x1e0] sm:$0xff]
  %v75 = vld [vmem:[%s1 + $0x1e8] sm:$0xff]
  %v76 = vld [vmem:[%s1 + $0x1f0] sm:$0xff]
  %v77 = vld [vmem:[%s1 + $0x1f8] sm:$0xff]
  %v78 = vld [vmem:[%s1 + $0x200] sm:$0xff]
  %v79 = vld [vmem:[%s1 + $0x208] sm:$0xff]
  %v80 = vld [vmem:[%s1 + $0x210] sm:$0xff]
  %v81 = vld [vmem:[%s1 + $0x218] sm:$0xff]
  %v82 = vld [vmem:[%s1 + $0x220] sm:$0xff]
  %v83 = vld [vmem:[%s1 + $0x228] sm:$0xff]
  %v84 = vld [vmem:[%s1 + $0x230] sm:$0xff]
  %v85 = vld [vmem:[%s1 + $0x238] sm:$0xff]
  %v86 = vld [vmem:[%s1 + $0x240] sm:$0xff]
  %v87 = vld [vmem:[%s1 + $0x248] sm:$0xff]
  %v88 = vld [vmem:[%s1 + $0x250] sm:$0xff]
  %v89 = vld [vmem:[%s1 + $0x258] sm:$0xff]
  %v90 = vld [vmem:[%s1 + $0x260] sm:$0xff]
  %v91 = vld [vmem:[%s1 + $0x268] sm:$0xff]
  %v92 = vld [vmem:[%s1 + $0x270] sm:$0xff]
  %v93 = vld [vmem:[%s1 + $0x278] sm:$0xff]
  %v94 = vld [vmem:[%s1 + $0x280] sm:$0xff]
  %v95 = vld [vmem:[%s1 + $0x288] sm:$0xff]
  %v96 = vld [vmem:[%s1 + $0x290] sm:$0xff]
  %v97 = vld [vmem:[%s1 + $0x298] sm:$0xff]
  %v98 = vld [vmem:[%s1 + $0x2a0] sm:$0xff]
  %v99 = vld [vmem:[%s1 + $0x2a8] sm:$0xff]
  %v100 = vld [vmem:[%s1 + $0x2b0] sm:$0xff]
  %v101 = vld [vmem:[%s1 + $0x2b8] sm:$0xff]
  %v102 = vld [vmem:[%s1 + $0x2c0] sm:$0xff]
  %v103 = vld [vmem:[%s1 + $0x2c8] sm:$0xff]
  %v104 = vld [vmem:[%s1 + $0x2d0] sm:$0xff]
  %v105 = vld [vmem:[%s1 + $0x2d8] sm:$0xff]
  %v106 = vld [vmem:[%s1 + $0x2e0] sm:$0xff]
  %v107 = vld [vmem:[%s1 + $0x2e8] sm:$0xff]
  %v108 = vld [vmem:[%s1 + $0x2f0] sm:$0xff]
  %v109 = vld [vmem:[%s1 + $0x2f8] sm:$0xff]
  %v110 = vld [vmem:[%s1 + $0x300] sm:$0xff]
  %v111 = vld [vmem:[%s1 + $0x308] sm:$0xff]
  %v112 = vld [vmem:[%s1 + $0x310] sm:$0x1]
  %v113 = vld [vmem:[%s1 + $0x311] sm:$0x1]
  %v114 = vld [vmem:[%s1 + $0x312] sm:$0x1]
  %v115 = vld [vmem:[%s1 + $0x313] sm:$0x1]
  %v116 = vld [vmem:[%s1 + $0x314] sm:$0x1]
  %v117 = vld [vmem:[%s1 + $0x315] sm:$0x1]
  %v118 = vld [vmem:[%s1 + $0x318] sm:$0x1]
  %v119 = vld [vmem:[%s1 + $0x319] sm:$0x1]
  %v120 = vld [vmem:[%s1 + $0x31a] sm:$0x1]
  %v121 = vld [vmem:[%s1 + $0x320] sm:$0xff]
  %v122 = vld [vmem:[%s1 + $0x328] sm:$0xff]
  %v123 = vld [vmem:[%s1 + $0x330] sm:$0xff]
  %v124 = vld [vmem:[%s1 + $0x338] sm:$0xff]
  %v125 = vld [vmem:[%s1 + $0x340] sm:$0xff]
  %v126 = vld [vmem:[%s1 + $0x348] sm:$0xff]
  %v127 = vld [vmem:[%s1 + $0x350] sm:$0xff]
  %v128 = vld [vmem:[%s1 + $0x358] sm:$0xff]
  %v129 = vld [vmem:[%s1 + $0x360] sm:$0xff]
  %v130 = vld [vmem:[%s1 + $0x368] sm:$0xff]
  %v131 = vld [vmem:[%s1 + $0x370] sm:$0xff]
  %v132 = vld [vmem:[%s1 + $0x378] sm:$0xff]
  %v133 = vld [vmem:[%s1 + $0x380] sm:$0xff]
  %v134 = vld [vmem:[%s1 + $0x388] sm:$0xff]
  %v135 = vld [vmem:[%s1 + $0x390] sm:$0xff]
  %v136 = vld [vmem:[%s1 + $0x398] sm:$0xff]
  %v137 = vld [vmem:[%s1 + $0x3a0] sm:$0xf]
  %v138 = vld [vmem:[%s2] sm:$0xff]
  %v139 = vld [vmem:[%s2 + $0x8] sm:$0xff]
  %v140 = vld [vmem:[%s2 + $0x10] sm:$0xff]
  %v141 = vld [vmem:[%s2 + $0x18] sm:$0xff]
  %v142 = vld [vmem:[%s2 + $0x20] sm:$0x1]
  %v143 = vld [vmem:[%s2 + $0x28] sm:$0xff]
  %v144 = vld [vmem:[%s2 + $0x30] sm:$0xff]
  %v145 = vld [vmem:[%s2 + $0x38] sm:$0xff]
  %v146 = vld [vmem:[%s2 + $0x40] sm:$0xff]
  %v147 = vld [vmem:[%s2 + $0x48] sm:$0x1]
  %v148 = vld [vmem:[%s2 + $0x50] sm:$0xff]
  %v149 = vld [vmem:[%s2 + $0x58] sm:$0xff]
  %v150 = vld [vmem:[%s2 + $0x60] sm:$0xff]
  %v151 = vld [vmem:[%s2 + $0x68] sm:$0xff]
  %v152 = vld [vmem:[%s2 + $0x70] sm:$0x1]
  %v153 = vld [vmem:[%s2 + $0x78] sm:$0xff]
  %v154 = vld [vmem:[%s2 + $0x80] sm:$0xff]
  %v155 = vld [vmem:[%s2 + $0x88] sm:$0xff]
  %v156 = vld [vmem:[%s2 + $0x90] sm:$0xff]
  %v157 = vld [vmem:[%s2 + $0x98] sm:$0xff]
  %v158 = vld [vmem:[%s2 + $0xa0] sm:$0xff]
  %v159 = vld [vmem:[%s0] sm:$0xff]
  %v160 = vld [vmem:[%s0 + $0x8] sm:$0xff]
  %v161 = vld [vmem:[%s0 + $0x10] sm:$0xff]
  %v162 = vld [vmem:[%s0 + $0x18] sm:$0xff]
  %v163 = vld [vmem:[%s0 + $0x20] sm:$0xff]
  %v164 = vld [vmem:[%s0 + $0x28] sm:$0xff]
  %v165 = vld [vmem:[%s0 + $0x30] sm:$0xff]
  %v166 = vld [vmem:[%s0 + $0x38] sm:$0xff]
  %v167 = vld [vmem:[%s0 + $0x40] sm:$0xff]
  %v168 = vld [vmem:[%s0 + $0x48] sm:$0xff]
  %v169 = vld [vmem:[%s0 + $0x50] sm:$0xff]
  %v170 = vld [vmem:[%s0 + $0x58] sm:$0xff]
  %171 = vmatprep.subr.mxu0 0.0
  %172 = vmatpush1.msra.mxu0 %v14
  %173 = vmatprep.subr.mxu0 0.0
  %174 = vmatpush1.msra.mxu0 %v15
  %175 = vmatprep.subr.mxu0 0.0
  %176 = vmatpush1.msra.mxu0 %v16
  %177 = vmatprep.subr.mxu0 0.0
  %178 = vmatpush1.msra.mxu0 %v17
  %179 = vmatprep.subr.mxu0 0.0
  %180 = vmatpush1.msra.mxu0 %v18
  %181 = vmatprep.subr.mxu0 0.0
  %182 = vmatpush1.msra.mxu0 %v19
  %183 = vmatprep.subr.mxu0 0.0
  %184 = vmatpush1.msra.mxu0 %v20
  %185 = vmatprep.subr.mxu0 0.0
  %186 = vmatpush1.msra.mxu0 %v21
  %187 = vmatprep.subr.mxu0 0.0
  %188 = vmatpush1.msra.mxu0 %v22
  %189 = vmatprep.subr.mxu0 0.0
  %190 = vmatpush1.msra.mxu0 %v23
  %191 = vmatprep.subr.mxu0 0.0
  %192 = vmatpush1.msra.mxu0 %v24
  %193 = vmatprep.subr.mxu0 0.0
  %194 = vmatpush1.msra.mxu0 %v25
  %195 = vmatprep.subr.mxu0 0.0
  %196 = vmatpush1.msra.mxu0 %v26
  %197 = vmatprep.subr.mxu0 0.0
  %198 = vmatpush1.msra.mxu0 %v27
  %199 = vmatprep.subr.mxu0 0.0
  %200 = vmatpush1.msra.mxu0 %v28
  %201 = vmatprep.subr.mxu0 0.0
  %202 = vmatpush1.msra.mxu0 %v29
  %203 = vmatprep.subr.mxu0 0.0
  %204 = vmatpush1.msra.mxu0 %v30
  %205 = vmatprep.subr.mxu0 0.0
  %206 = vmatpush1.msra.mxu0 %v31
  %207 = vmatprep.subr.mxu0 0.0
  %208 = vmatpush1.msra.mxu0 %v32
  %209 = vmatprep.subr.mxu0 0.0
  %210 = vmatpush1.msra.mxu0 %v33
  %211 = vmatprep.subr.mxu0 0.0
  %212 = vmatpush1.msra.mxu0 %v34
  %213 = vmatprep.subr.mxu0 0.0
  %214 = vmatpush1.msra.mxu0 %v35
  %215 = vmatprep.subr.mxu0 0.0
  %216 = vmatpush1.msra.mxu0 %v36
  %217 = vmatprep.subr.mxu0 0.0
  %218 = vmatpush1.msra.mxu0 %v37
  %219 = vmatprep.subr.mxu0 0.0
  %220 = vmatpush1.msra.mxu0 %v38
  %221 = vmatprep.subr.mxu0 0.0
  %222 = vmatpush1.msra.mxu0 %v39
  %223 = vmatprep.subr.mxu0 0.0
  %224 = vmatpush1.msra.mxu0 %v40
  %225 = vmatprep.subr.mxu0 0.0
  %226 = vmatpush1.msra.mxu0 %v41
  %227 = vmatprep.subr.mxu0 0.0
  %228 = vmatpush1.msra.mxu0 %v42
  %229 = vmatprep.subr.mxu0 0.0
  %230 = vmatpush1.msra.mxu0 %v43
  %231 = vmatprep.subr.mxu0 0.0
  %232 = vmatpush1.msra.mxu0 %v44
  %233 = vmatprep.subr.mxu0 0.0
  %234 = vmatpush1.msra.mxu0 %v45
  %235 = vmatprep.mubr.f32.mxu0 %v160
  %236 = vmatmul.mubr.f32.gmra.mrb[0].mxu0 %v159
  %v237 = vpop.f32.mrb[0].mxu0
  %v238 = vadd.f32 %v110, %v237
  %v239 = vpop.f32.mrb[0].mxu0
  %240 = vmatprep.mubr.f32.mxu0 %v166
  %241 = vmatmul.mubr.f32.gmra.mrb[0].mxu0 %v165
  %v242 = vpop.f32.mrb[0].mxu0
  %v243 = vadd.f32 %v111, %v242
  %v244 = vpop.f32.mrb[0].mxu0
  %245 = vdwg.mxu0
  %246 = vmatprep.subr.mxu0 0.0
  %247 = vmatpush1.msra.mxu0 %v46
  %248 = vmatprep.subr.mxu0 0.0
  %249 = vmatpush1.msra.mxu0 %v47
  %250 = vmatprep.subr.mxu0 0.0
  %251 = vmatpush1.msra.mxu0 %v48
  %252 = vmatprep.subr.mxu0 0.0
  %253 = vmatpush1.msra.mxu0 %v49
  %254 = vmatprep.subr.mxu0 0.0
  %255 = vmatpush1.msra.mxu0 %v50
  %256 = vmatprep.subr.mxu0 0.0
  %257 = vmatpush1.msra.mxu0 %v51
  %258 = vmatprep.subr.mxu0 0.0
  %259 = vmatpush1.msra.mxu0 %v52
  %260 = vmatprep.subr.mxu0 0.0
  %261 = vmatpush1.msra.mxu0 %v53
  %262 = vmatprep.subr.mxu0 0.0
  %263 = vmatpush1.msra.mxu0 %v54
  %264 = vmatprep.subr.mxu0 0.0
  %265 = vmatpush1.msra.mxu0 %v55
  %266 = vmatprep.subr.mxu0 0.0
  %267 = vmatpush1.msra.mxu0 %v56
  %268 = vmatprep.subr.mxu0 0.0
  %269 = vmatpush1.msra.mxu0 %v57
  %270 = vmatprep.subr.mxu0 0.0
  %271 = vmatpush1.msra.mxu0 %v58
  %272 = vmatprep.subr.mxu0 0.0
  %273 = vmatpush1.msra.mxu0 %v59
  %274 = vmatprep.subr.mxu0 0.0
  %275 = vmatpush1.msra.mxu0 %v60
  %276 = vmatprep.subr.mxu0 0.0
  %277 = vmatpush1.msra.mxu0 %v61
  %278 = vmatprep.subr.mxu0 0.0
  %279 = vmatpush1.msra.mxu0 %v62
  %280 = vmatprep.subr.mxu0 0.0
  %281 = vmatpush1.msra.mxu0 %v63
  %282 = vmatprep.subr.mxu0 0.0
  %283 = vmatpush1.msra.mxu0 %v64
  %284 = vmatprep.subr.mxu0 0.0
  %285 = vmatpush1.msra.mxu0 %v65
  %286 = vmatprep.subr.mxu0 0.0
  %287 = vmatpush1.msra.mxu0 %v66
  %288 = vmatprep.subr.mxu0 0.0
  %289 = vmatpush1.msra.mxu0 %v67
  %290 = vmatprep.subr.mxu0 0.0
  %291 = vmatpush1.msra.mxu0 %v68
  %292 = vmatprep.subr.mxu0 0.0
  %293 = vmatpush1.msra.mxu0 %v69
  %294 = vmatprep.subr.mxu0 0.0
  %295 = vmatpush1.msra.mxu0 %v70
  %296 = vmatprep.subr.mxu0 0.0
  %297 = vmatpush1.msra.mxu0 %v71
  %298 = vmatprep.subr.mxu0 0.0
  %299 = vmatpush1.msra.mxu0 %v72
  %300 = vmatprep.subr.mxu0 0.0
  %301 = vmatpush1.msra.mxu0 %v73
  %302 = vmatprep.subr.mxu0 0.0
  %303 = vmatpush1.msra.mxu0 %v74
  %304 = vmatprep.subr.mxu0 0.0
  %305 = vmatpush1.msra.mxu0 %v75
  %306 = vmatprep.subr.mxu0 0.0
  %307 = vmatpush1.msra.mxu0 %v76
  %308 = vmatprep.subr.mxu0 0.0
  %309 = vmatpush1.msra.mxu0 %v77
  %310 = vmatprep.mubr.f32.mxu0 %v162
  %311 = vmatmul.mubr.f32.gmra.mrb[0].mxu0 %v161
  %v312 = vpop.f32.mrb[0].mxu0
  %v313 = vadd.f32 %v238, %v312
  %v314 = vpop.f32.mrb[0].mxu0
  %315 = vmatprep.mubr.f32.mxu0 %v168
  %316 = vmatmul.mubr.f32.gmra.mrb[0].mxu0 %v167
  %v317 = vpop.f32.mrb[0].mxu0
  %v318 = vadd.f32 %v243, %v317
  %v319 = vpop.f32.mrb[0].mxu0
  %320 = vdwg.mxu0
  %321 = vmatprep.subr.mxu0 0.0
  %322 = vmatpush1.msra.mxu0 %v78
  %323 = vmatprep.subr.mxu0 0.0
  %324 = vmatpush1.msra.mxu0 %v79
  %325 = vmatprep.subr.mxu0 0.0
  %326 = vmatpush1.msra.mxu0 %v80
  %327 = vmatprep.subr.mxu0 0.0
  %328 = vmatpush1.msra.mxu0 %v81
  %329 = vmatprep.subr.mxu0 0.0
  %330 = vmatpush1.msra.mxu0 %v82
  %331 = vmatprep.subr.mxu0 0.0
  %332 = vmatpush1.msra.mxu0 %v83
  %333 = vmatprep.subr.mxu0 0.0
  %334 = vmatpush1.msra.mxu0 %v84
  %335 = vmatprep.subr.mxu0 0.0
  %336 = vmatpush1.msra.mxu0 %v85
  %337 = vmatprep.subr.mxu0 0.0
  %338 = vmatpush1.msra.mxu0 %v86
  %339 = vmatprep.subr.mxu0 0.0
  %340 = vmatpush1.msra.mxu0 %v87
  %341 = vmatprep.subr.mxu0 0.0
  %342 = vmatpush1.msra.mxu0 %v88
  %343 = vmatprep.subr.mxu0 0.0
  %344 = vmatpush1.msra.mxu0 %v89
  %345 = vmatprep.subr.mxu0 0.0
  %346 = vmatpush1.msra.mxu0 %v90
  %347 = vmatprep.subr.mxu0 0.0
  %348 = vmatpush1.msra.mxu0 %v91
  %349 = vmatprep.subr.mxu0 0.0
  %350 = vmatpush1.msra.mxu0 %v92
  %351 = vmatprep.subr.mxu0 0.0
  %352 = vmatpush1.msra.mxu0 %v93
  %353 = vmatprep.subr.mxu0 0.0
  %354 = vmatpush1.msra.mxu0 %v94
  %355 = vmatprep.subr.mxu0 0.0
  %356 = vmatpush1.msra.mxu0 %v95
  %357 = vmatprep.subr.mxu0 0.0
  %358 = vmatpush1.msra.mxu0 %v96
  %359 = vmatprep.subr.mxu0 0.0
  %360 = vmatpush1.msra.mxu0 %v97
  %361 = vmatprep.subr.mxu0 0.0
  %362 = vmatpush1.msra.mxu0 %v98
  %363 = vmatprep.subr.mxu0 0.0
  %364 = vmatpush1.msra.mxu0 %v99
  %365 = vmatprep.subr.mxu0 0.0
  %366 = vmatpush1.msra.mxu0 %v100
  %367 = vmatprep.subr.mxu0 0.0
  %368 = vmatpush1.msra.mxu0 %v101
  %369 = vmatprep.subr.mxu0 0.0
  %370 = vmatpush1.msra.mxu0 %v102
  %371 = vmatprep.subr.mxu0 0.0
  %372 = vmatpush1.msra.mxu0 %v103
  %373 = vmatprep.subr.mxu0 0.0
  %374 = vmatpush1.msra.mxu0 %v104
  %375 = vmatprep.subr.mxu0 0.0
  %376 = vmatpush1.msra.mxu0 %v105
  %377 = vmatprep.subr.mxu0 0.0
  %378 = vmatpush1.msra.mxu0 %v106
  %379 = vmatprep.subr.mxu0 0.0
  %380 = vmatpush1.msra.mxu0 %v107
  %381 = vmatprep.subr.mxu0 0.0
  %382 = vmatpush1.msra.mxu0 %v108
  %383 = vmatprep.subr.mxu0 0.0
  %384 = vmatpush1.msra.mxu0 %v109
  %385 = vmatprep.mubr.f32.mxu0 %v164
  %386 = vmatmul.mubr.f32.gmra.mrb[0].mxu0 %v163
  %v387 = vpop.f32.mrb[0].mxu0
  %v388 = vadd.f32 %v313, %v387
  %v389 = vpop.f32.mrb[0].mxu0
  %390 = vmatprep.mubr.f32.mxu0 %v170
  %391 = vmatmul.mubr.f32.gmra.mrb[0].mxu0 %v169
  %v392 = vpop.f32.mrb[0].mxu0
  %v393 = vadd.f32 %v318, %v392
  %v394 = vpop.f32.mrb[0].mxu0
  %395 = vdwg.mxu0
  %vm396 = vcmask 261120
  %v397 = vsel %vm396, %v388, 0.0
  %398 = vadd.xlane.f32.xlu0 %v397
  %v399 = vpop.xlane.xlu0 %398
  %v400 = vsel %vm396, %v393, 0.0
  %401 = vadd.xlane.f32.xlu0 %v400
  %v402 = vpop.xlane.xlu0 %401
  %v403 = vrcp.pop 32.0
  %v404 = vmul.f32 %v399, %v403
  %v405 = vmul.f32 %v402, %v403
  %v406 = vsub.f32 %v388, %v404
  %v407 = vsub.f32 %v393, %v405
  %v408 = vmul.f32 %v406, %v406
  %v409 = vmul.f32 %v407, %v407
  %v410 = vsel %vm396, %v408, 0.0
  %411 = vadd.xlane.f32.xlu0 %v410
  %v412 = vpop.xlane.xlu0 %411
  %v413 = vsel %vm396, %v409, 0.0
  %414 = vadd.xlane.f32.xlu0 %v413
  %v415 = vpop.xlane.xlu0 %414
  %v416 = vmul.f32 %v412, %v403
  %v417 = vmul.f32 %v415, %v403
  %v418 = vadd.f32 %v416, 1e-05
  %v419 = vadd.f32 %v417, 1e-05
  %v420 = vrsqrt.pop %v418
  %v421 = vrsqrt.pop %v419
  %v422 = vmul.f32 %v406, %v420
  %v423 = vmul.f32 %v407, %v421
  %v424 = vlaneseq
  %v425 = vshrl.u32 %v424, 7
  %v426 = vsub.s32 0, %v425
  %v427 = vrot.slane %v112, %v426
  %v428 = vmul.f32 %v422, %v427
  %v429 = vmul.f32 %v423, %v427
  %v430 = vlaneseq
  %v431 = vshrl.u32 %v430, 7
  %v432 = vsub.s32 0, %v431
  %v433 = vrot.slane %v113, %v432
  %v434 = vadd.f32 %v428, %v433
  %v435 = vadd.f32 %v429, %v433
  %v436 = vlaneseq
  %v437 = vshrl.u32 %v436, 7
  %v438 = vsub.s32 0, %v437
  %v439 = vrot.slane %v142, %v438
  %v441 = vsel %vm396, %v434, 0
  %v444 = vsel %vm396, %v435, 0
  %446 = vmatprep.subr.mxu0 0.0
  %447 = vmatpush1.msra.mxu0 %v138
  %448 = vmatprep.subr.mxu0 0.0
  %449 = vmatpush1.msra.mxu0 %v139
  %450 = vmatprep.subr.mxu0 0.0
  %451 = vmatpush1.msra.mxu0 %v140
  %452 = vmatprep.subr.mxu0 0.0
  %453 = vmatpush1.msra.mxu0 %v141
  %454 = vmatprep.subr.mxu0 0.0
  %455 = vmatpush1.msra.mxu0 0.0
  %456 = vmatprep.subr.mxu0 0.0
  %457 = vmatpush1.msra.mxu0 0.0
  %458 = vmatprep.subr.mxu0 0.0
  %459 = vmatpush1.msra.mxu0 0.0
  %460 = vmatprep.subr.mxu0 0.0
  %461 = vmatpush1.msra.mxu0 0.0
  %462 = vmatprep.subr.mxu0 0.0
  %463 = vmatpush1.msra.mxu0 0.0
  %464 = vmatprep.subr.mxu0 0.0
  %465 = vmatpush1.msra.mxu0 0.0
  %466 = vmatprep.subr.mxu0 0.0
  %467 = vmatpush1.msra.mxu0 0.0
  %468 = vmatprep.subr.mxu0 0.0
  %469 = vmatpush1.msra.mxu0 0.0
  %470 = vmatprep.subr.mxu0 0.0
  %471 = vmatpush1.msra.mxu0 0.0
  %472 = vmatprep.subr.mxu0 0.0
  %473 = vmatpush1.msra.mxu0 0.0
  %474 = vmatprep.subr.mxu0 0.0
  %475 = vmatpush1.msra.mxu0 0.0
  %476 = vmatprep.subr.mxu0 0.0
  %477 = vmatpush1.msra.mxu0 0.0
  %478 = vmatprep.subr.mxu0 0.0
  %479 = vmatpush1.msra.mxu0 0.0
  %480 = vmatprep.subr.mxu0 0.0
  %481 = vmatpush1.msra.mxu0 0.0
  %482 = vmatprep.subr.mxu0 0.0
  %483 = vmatpush1.msra.mxu0 0.0
  %484 = vmatprep.subr.mxu0 0.0
  %485 = vmatpush1.msra.mxu0 0.0
  %486 = vmatprep.subr.mxu0 0.0
  %487 = vmatpush1.msra.mxu0 0.0
  %488 = vmatprep.subr.mxu0 0.0
  %489 = vmatpush1.msra.mxu0 0.0
  %490 = vmatprep.subr.mxu0 0.0
  %491 = vmatpush1.msra.mxu0 0.0
  %492 = vmatprep.subr.mxu0 0.0
  %493 = vmatpush1.msra.mxu0 0.0
  %494 = vmatprep.subr.mxu0 0.0
  %495 = vmatpush1.msra.mxu0 0.0
  %496 = vmatprep.subr.mxu0 0.0
  %497 = vmatpush1.msra.mxu0 0.0
  %498 = vmatprep.subr.mxu0 0.0
  %499 = vmatpush1.msra.mxu0 0.0
  %500 = vmatprep.subr.mxu0 0.0
  %501 = vmatpush1.msra.mxu0 0.0
  %502 = vmatprep.subr.mxu0 0.0
  %503 = vmatpush1.msra.mxu0 0.0
  %504 = vmatprep.subr.mxu0 0.0
  %505 = vmatpush1.msra.mxu0 0.0
  %506 = vmatprep.subr.mxu0 0.0
  %507 = vmatpush1.msra.mxu0 0.0
  %508 = vmatprep.subr.mxu0 0.0
  %509 = vmatpush1.msra.mxu0 0.0
  %510 = vmatprep.mubr.f32.mxu0 0.0
  %511 = vmatmul.mubr.f32.gmra.mrb[0].mxu0 %v441
  %v512 = vpop.f32.mrb[0].mxu0
  %v513 = vadd.f32 %v439, %v512
  %v514 = vpop.f32.mrb[0].mxu0
  %515 = vmatprep.mubr.f32.mxu0 0.0
  %516 = vmatmul.mubr.f32.gmra.mrb[0].mxu0 %v444
  %v517 = vpop.f32.mrb[0].mxu0
  %v518 = vadd.f32 %v439, %v517
  %v519 = vpop.f32.mrb[0].mxu0
  %520 = vdwg.mxu0
  %523 = vrot.lane.b32.xlu0 %v513, 96
  %v524 = vpop.permute.xlu0 %523
  %525 = vrot.lane.b32.xlu0 %v518, 96
  %v526 = vpop.permute.xlu0 %525
  %v527 = vsel %vm396, %v513, 0
  %v529 = vsel %vm396, %v518, 0
  %v531 = vsel %vm396, %v524, 0
  %v533 = vsel %vm396, %v526, 0
  %535 = vmatprep.subr.mxu0 0.0
  %536 = vmatpush1.xpose.msra.mxu0 %v531
  %537 = vmatprep.subr.mxu0 0.0
  %538 = vmatpush1.xpose.msra.mxu0 %v533
  %539 = vmatprep.subr.mxu0 0.0
  %540 = vmatpush1.xpose.msra.mxu0 0.0
  %541 = vmatprep.subr.mxu0 0.0
  %542 = vmatpush1.xpose.msra.mxu0 0.0
  %543 = vmatprep.subr.mxu0 0.0
  %544 = vmatpush1.xpose.msra.mxu0 0.0
  %545 = vmatprep.subr.mxu0 0.0
  %546 = vmatpush1.xpose.msra.mxu0 0.0
  %547 = vmatprep.subr.mxu0 0.0
  %548 = vmatpush1.xpose.msra.mxu0 0.0
  %549 = vmatprep.subr.mxu0 0.0
  %550 = vmatpush1.xpose.msra.mxu0 0.0
  %551 = vmatprep.subr.mxu0 0.0
  %552 = vmatpush1.xpose.msra.mxu0 0.0
  %553 = vmatprep.subr.mxu0 0.0
  %554 = vmatpush1.xpose.msra.mxu0 0.0
  %555 = vmatprep.subr.mxu0 0.0
  %556 = vmatpush1.xpose.msra.mxu0 0.0
  %557 = vmatprep.subr.mxu0 0.0
  %558 = vmatpush1.xpose.msra.mxu0 0.0
  %559 = vmatprep.subr.mxu0 0.0
  %560 = vmatpush1.xpose.msra.mxu0 0.0
  %561 = vmatprep.subr.mxu0 0.0
  %562 = vmatpush1.xpose.msra.mxu0 0.0
  %563 = vmatprep.subr.mxu0 0.0
  %564 = vmatpush1.xpose.msra.mxu0 0.0
  %565 = vmatprep.subr.mxu0 0.0
  %566 = vmatpush1.xpose.msra.mxu0 0.0
  %567 = vmatprep.subr.mxu0 0.0
  %568 = vmatpush1.xpose.msra.mxu0 0.0
  %569 = vmatprep.subr.mxu0 0.0
  %570 = vmatpush1.xpose.msra.mxu0 0.0
  %571 = vmatprep.subr.mxu0 0.0
  %572 = vmatpush1.xpose.msra.mxu0 0.0
  %573 = vmatprep.subr.mxu0 0.0
  %574 = vmatpush1.xpose.msra.mxu0 0.0
  %575 = vmatprep.subr.mxu0 0.0
  %576 = vmatpush1.xpose.msra.mxu0 0.0
  %577 = vmatprep.subr.mxu0 0.0
  %578 = vmatpush1.xpose.msra.mxu0 0.0
  %579 = vmatprep.subr.mxu0 0.0
  %580 = vmatpush1.xpose.msra.mxu0 0.0
  %581 = vmatprep.subr.mxu0 0.0
  %582 = vmatpush1.xpose.msra.mxu0 0.0
  %583 = vmatprep.subr.mxu0 0.0
  %584 = vmatpush1.xpose.msra.mxu0 0.0
  %585 = vmatprep.subr.mxu0 0.0
  %586 = vmatpush1.xpose.msra.mxu0 0.0
  %587 = vmatprep.subr.mxu0 0.0
  %588 = vmatpush1.xpose.msra.mxu0 0.0
  %589 = vmatprep.subr.mxu0 0.0
  %590 = vmatpush1.xpose.msra.mxu0 0.0
  %591 = vmatprep.subr.mxu0 0.0
  %592 = vmatpush1.xpose.msra.mxu0 0.0
  %593 = vmatprep.subr.mxu0 0.0
  %594 = vmatpush1.xpose.msra.mxu0 0.0
  %595 = vmatprep.subr.mxu0 0.0
  %596 = vmatpush1.xpose.msra.mxu0 0.0
  %597 = vmatprep.subr.mxu0 0.0
  %598 = vmatpush1.xpose.msra.mxu0 0.0
  %599 = vmatprep.mubr.f32.mxu0 0.0
  %600 = vmatmul.mubr.f32.gmra.mrb[0].mxu0 %v527
  %v601 = vpop.f32.mrb[0].mxu0
  %v602 = vadd.f32 0.0, %v601
  %v603 = vpop.f32.mrb[0].mxu0
  %604 = vmatprep.mubr.f32.mxu0 0.0
  %605 = vmatmul.mubr.f32.gmra.mrb[0].mxu0 %v529
  %v606 = vpop.f32.mrb[0].mxu0
  %v607 = vadd.f32 0.0, %v606
  %v608 = vpop.f32.mrb[0].mxu0
  %609 = vdwg.mxu0
  %v610 = vmul.f32 %v602, 0.17677669
  %v611 = vmul.f32 %v607, 0.17677669
  %vm612 = vcmask 130048
  %v613 = vsel %vm612, %v610, -inf
  %614 = vmax.xlane.f32.xlu0 %v613
  %v615 = vpop.xlane.xlu0 %614
  %v616 = vsel %vm612, %v611, -inf
  %617 = vmax.xlane.f32.xlu0 %v616
  %v618 = vpop.xlane.xlu0 %617
  %v619 = vsub.f32 %v610, %v615
  %v620 = vsub.f32 %v611, %v618
  %v621 = vmul.f32 %v619, 1.442695
  %v622 = vpow.pop %v621
  %v623 = vmul.f32 %v620, 1.442695
  %v624 = vpow.pop %v623
  %v625 = vsel %vm612, %v622, 0.0
  %626 = vadd.xlane.f32.xlu0 %v625
  %v627 = vpop.xlane.xlu0 %626
  %v628 = vsel %vm612, %v624, 0.0
  %629 = vadd.xlane.f32.xlu0 %v628
  %v630 = vpop.xlane.xlu0 %629
  %v631 = vrcp.pop %v627
  %v632 = vrcp.pop %v630
  %v633 = vmul.f32 %v622, %v631
  %v634 = vmul.f32 %v624, %v632
  %635 = vrot.lane.b32.xlu0 %v513, 64
  %v636 = vpop.permute.xlu0 %635
  %637 = vrot.lane.b32.xlu0 %v518, 64
  %v638 = vpop.permute.xlu0 %637
  %v642 = vsel %vm612, %v633, 0
  %v645 = vsel %vm612, %v634, 0
  %647 = vmatprep.subr.mxu0 0.0
  %648 = vmatpush1.msra.mxu0 %v636
  %649 = vmatprep.subr.mxu0 0.0
  %650 = vmatpush1.msra.mxu0 %v638
  %651 = vmatprep.subr.mxu0 0.0
  %652 = vmatpush1.msra.mxu0 0.0
  %653 = vmatprep.subr.mxu0 0.0
  %654 = vmatpush1.msra.mxu0 0.0
  %655 = vmatprep.subr.mxu0 0.0
  %656 = vmatpush1.msra.mxu0 0.0
  %657 = vmatprep.subr.mxu0 0.0
  %658 = vmatpush1.msra.mxu0 0.0
  %659 = vmatprep.subr.mxu0 0.0
  %660 = vmatpush1.msra.mxu0 0.0
  %661 = vmatprep.subr.mxu0 0.0
  %662 = vmatpush1.msra.mxu0 0.0
  %663 = vmatprep.subr.mxu0 0.0
  %664 = vmatpush1.msra.mxu0 0.0
  %665 = vmatprep.subr.mxu0 0.0
  %666 = vmatpush1.msra.mxu0 0.0
  %667 = vmatprep.subr.mxu0 0.0
  %668 = vmatpush1.msra.mxu0 0.0
  %669 = vmatprep.subr.mxu0 0.0
  %670 = vmatpush1.msra.mxu0 0.0
  %671 = vmatprep.subr.mxu0 0.0
  %672 = vmatpush1.msra.mxu0 0.0
  %673 = vmatprep.subr.mxu0 0.0
  %674 = vmatpush1.msra.mxu0 0.0
  %675 = vmatprep.subr.mxu0 0.0
  %676 = vmatpush1.msra.mxu0 0.0
  %677 = vmatprep.subr.mxu0 0.0
  %678 = vmatpush1.msra.mxu0 0.0
  %679 = vmatprep.subr.mxu0 0.0
  %680 = vmatpush1.msra.mxu0 0.0
  %681 = vmatprep.subr.mxu0 0.0
  %682 = vmatpush1.msra.mxu0 0.0
  %683 = vmatprep.subr.mxu0 0.0
  %684 = vmatpush1.msra.mxu0 0.0
  %685 = vmatprep.subr.mxu0 0.0
  %686 = vmatpush1.msra.mxu0 0.0
  %687 = vmatprep.subr.mxu0 0.0
  %688 = vmatpush1.msra.mxu0 0.0
  %689 = vmatprep.subr.mxu0 0.0
  %690 = vmatpush1.msra.mxu0 0.0
  %691 = vmatprep.subr.mxu0 0.0
  %692 = vmatpush1.msra.mxu0 0.0
  %693 = vmatprep.subr.mxu0 0.0
  %694 = vmatpush1.msra.mxu0 0.0
  %695 = vmatprep.subr.mxu0 0.0
  %696 = vmatpush1.msra.mxu0 0.0
  %697 = vmatprep.subr.mxu0 0.0
  %698 = vmatpush1.msra.mxu0 0.0
  %699 = vmatprep.subr.mxu0 0.0
  %700 = vmatpush1.msra.mxu0 0.0
  %701 = vmatprep.subr.mxu0 0.0
  %702 = vmatpush1.msra.mxu0 0.0
  %703 = vmatprep.subr.mxu0 0.0
  %704 = vmatpush1.msra.mxu0 0.0
  %705 = vmatprep.subr.mxu0 0.0
  %706 = vmatpush1.msra.mxu0 0.0
  %707 = vmatprep.subr.mxu0 0.0
  %708 = vmatpush1.msra.mxu0 0.0
  %709 = vmatprep.subr.mxu0 0.0
  %710 = vmatpush1.msra.mxu0 0.0
  %711 = vmatprep.mubr.f32.mxu0 0.0
  %712 = vmatmul.mubr.f32.gmra.mrb[0].mxu0 %v642
  %v713 = vpop.f32.mrb[0].mxu0
  %v714 = vadd.f32 0.0, %v713
  %v715 = vpop.f32.mrb[0].mxu0
  %716 = vmatprep.mubr.f32.mxu0 0.0
  %717 = vmatmul.mubr.f32.gmra.mrb[0].mxu0 %v645
  %v718 = vpop.f32.mrb[0].mxu0
  %v719 = vadd.f32 0.0, %v718
  %v720 = vpop.f32.mrb[0].mxu0
  %721 = vdwg.mxu0
  %v722 = vlaneseq
  %v723 = vshrl.u32 %v722, 7
  %v724 = vsub.s32 0, %v723
  %v725 = vrot.slane %v118, %v724
  %v727 = vsel %vm396, %v714, 0
  %v730 = vsel %vm396, %v719, 0
  %732 = vmatprep.subr.mxu0 0.0
  %733 = vmatpush1.msra.mxu0 %v121
  %734 = vmatprep.subr.mxu0 0.0
  %735 = vmatpush1.msra.mxu0 %v122
  %736 = vmatprep.subr.mxu0 0.0
  %737 = vmatpush1.msra.mxu0 %v123
  %738 = vmatprep.subr.mxu0 0.0
  %739 = vmatpush1.msra.mxu0 %v124
  %740 = vmatprep.subr.mxu0 0.0
  %741 = vmatpush1.msra.mxu0 0.0
  %742 = vmatprep.subr.mxu0 0.0
  %743 = vmatpush1.msra.mxu0 0.0
  %744 = vmatprep.subr.mxu0 0.0
  %745 = vmatpush1.msra.mxu0 0.0
  %746 = vmatprep.subr.mxu0 0.0
  %747 = vmatpush1.msra.mxu0 0.0
  %748 = vmatprep.subr.mxu0 0.0
  %749 = vmatpush1.msra.mxu0 0.0
  %750 = vmatprep.subr.mxu0 0.0
  %751 = vmatpush1.msra.mxu0 0.0
  %752 = vmatprep.subr.mxu0 0.0
  %753 = vmatpush1.msra.mxu0 0.0
  %754 = vmatprep.subr.mxu0 0.0
  %755 = vmatpush1.msra.mxu0 0.0
  %756 = vmatprep.subr.mxu0 0.0
  %757 = vmatpush1.msra.mxu0 0.0
  %758 = vmatprep.subr.mxu0 0.0
  %759 = vmatpush1.msra.mxu0 0.0
  %760 = vmatprep.subr.mxu0 0.0
  %761 = vmatpush1.msra.mxu0 0.0
  %762 = vmatprep.subr.mxu0 0.0
  %763 = vmatpush1.msra.mxu0 0.0
  %764 = vmatprep.subr.mxu0 0.0
  %765 = vmatpush1.msra.mxu0 0.0
  %766 = vmatprep.subr.mxu0 0.0
  %767 = vmatpush1.msra.mxu0 0.0
  %768 = vmatprep.subr.mxu0 0.0
  %769 = vmatpush1.msra.mxu0 0.0
  %770 = vmatprep.subr.mxu0 0.0
  %771 = vmatpush1.msra.mxu0 0.0
  %772 = vmatprep.subr.mxu0 0.0
  %773 = vmatpush1.msra.mxu0 0.0
  %774 = vmatprep.subr.mxu0 0.0
  %775 = vmatpush1.msra.mxu0 0.0
  %776 = vmatprep.subr.mxu0 0.0
  %777 = vmatpush1.msra.mxu0 0.0
  %778 = vmatprep.subr.mxu0 0.0
  %779 = vmatpush1.msra.mxu0 0.0
  %780 = vmatprep.subr.mxu0 0.0
  %781 = vmatpush1.msra.mxu0 0.0
  %782 = vmatprep.subr.mxu0 0.0
  %783 = vmatpush1.msra.mxu0 0.0
  %784 = vmatprep.subr.mxu0 0.0
  %785 = vmatpush1.msra.mxu0 0.0
  %786 = vmatprep.subr.mxu0 0.0
  %787 = vmatpush1.msra.mxu0 0.0
  %788 = vmatprep.subr.mxu0 0.0
  %789 = vmatpush1.msra.mxu0 0.0
  %790 = vmatprep.subr.mxu0 0.0
  %791 = vmatpush1.msra.mxu0 0.0
  %792 = vmatprep.subr.mxu0 0.0
  %793 = vmatpush1.msra.mxu0 0.0
  %794 = vmatprep.subr.mxu0 0.0
  %795 = vmatpush1.msra.mxu0 0.0
  %796 = vmatprep.mubr.f32.mxu0 0.0
  %797 = vmatmul.mubr.f32.gmra.mrb[0].mxu0 %v727
  %v798 = vpop.f32.mrb[0].mxu0
  %v799 = vadd.f32 %v725, %v798
  %v800 = vpop.f32.mrb[0].mxu0
  %801 = vmatprep.mubr.f32.mxu0 0.0
  %802 = vmatmul.mubr.f32.gmra.mrb[0].mxu0 %v730
  %v803 = vpop.f32.mrb[0].mxu0
  %v804 = vadd.f32 %v725, %v803
  %v805 = vpop.f32.mrb[0].mxu0
  %806 = vdwg.mxu0
  %v807 = vadd.f32 %v388, %v799
  %v808 = vadd.f32 %v393, %v804
  %v809 = vsel %vm396, %v807, 0.0
  %810 = vadd.xlane.f32.xlu0 %v809
  %v811 = vpop.xlane.xlu0 %810
  %v812 = vsel %vm396, %v808, 0.0
  %813 = vadd.xlane.f32.xlu0 %v812
  %v814 = vpop.xlane.xlu0 %813
  %v815 = vmul.f32 %v811, %v403
  %v816 = vmul.f32 %v814, %v403
  %v817 = vsub.f32 %v807, %v815
  %v818 = vsub.f32 %v808, %v816
  %v819 = vmul.f32 %v817, %v817
  %v820 = vmul.f32 %v818, %v818
  %v821 = vsel %vm396, %v819, 0.0
  %822 = vadd.xlane.f32.xlu0 %v821
  %v823 = vpop.xlane.xlu0 %822
  %v824 = vsel %vm396, %v820, 0.0
  %825 = vadd.xlane.f32.xlu0 %v824
  %v826 = vpop.xlane.xlu0 %825
  %v827 = vmul.f32 %v823, %v403
  %v828 = vmul.f32 %v826, %v403
  %v829 = vadd.f32 %v827, 1e-05
  %v830 = vadd.f32 %v828, 1e-05
  %v831 = vrsqrt.pop %v829
  %v832 = vrsqrt.pop %v830
  %v833 = vmul.f32 %v817, %v831
  %v834 = vmul.f32 %v818, %v832
  %v835 = vlaneseq
  %v836 = vshrl.u32 %v835, 7
  %v837 = vsub.s32 0, %v836
  %v838 = vrot.slane %v114, %v837
  %v839 = vmul.f32 %v833, %v838
  %v840 = vmul.f32 %v834, %v838
  %v841 = vlaneseq
  %v842 = vshrl.u32 %v841, 7
  %v843 = vsub.s32 0, %v842
  %v844 = vrot.slane %v115, %v843
  %v845 = vadd.f32 %v839, %v844
  %v846 = vadd.f32 %v840, %v844
  %v847 = vlaneseq
  %v848 = vshrl.u32 %v847, 7
  %v849 = vsub.s32 0, %v848
  %v850 = vrot.slane %v147, %v849
  %v852 = vsel %vm396, %v845, 0
  %v855 = vsel %vm396, %v846, 0
  %857 = vmatprep.subr.mxu0 0.0
  %858 = vmatpush1.msra.mxu0 %v143
  %859 = vmatprep.subr.mxu0 0.0
  %860 = vmatpush1.msra.mxu0 %v144
  %861 = vmatprep.subr.mxu0 0.0
  %862 = vmatpush1.msra.mxu0 %v145
  %863 = vmatprep.subr.mxu0 0.0
  %864 = vmatpush1.msra.mxu0 %v146
  %865 = vmatprep.subr.mxu0 0.0
  %866 = vmatpush1.msra.mxu0 0.0
  %867 = vmatprep.subr.mxu0 0.0
  %868 = vmatpush1.msra.mxu0 0.0
  %869 = vmatprep.subr.mxu0 0.0
  %870 = vmatpush1.msra.mxu0 0.0
  %871 = vmatprep.subr.mxu0 0.0
  %872 = vmatpush1.msra.mxu0 0.0
  %873 = vmatprep.subr.mxu0 0.0
  %874 = vmatpush1.msra.mxu0 0.0
  %875 = vmatprep.subr.mxu0 0.0
  %876 = vmatpush1.msra.mxu0 0.0
  %877 = vmatprep.subr.mxu0 0.0
  %878 = vmatpush1.msra.mxu0 0.0
  %879 = vmatprep.subr.mxu0 0.0
  %880 = vmatpush1.msra.mxu0 0.0
  %881 = vmatprep.subr.mxu0 0.0
  %882 = vmatpush1.msra.mxu0 0.0
  %883 = vmatprep.subr.mxu0 0.0
  %884 = vmatpush1.msra.mxu0 0.0
  %885 = vmatprep.subr.mxu0 0.0
  %886 = vmatpush1.msra.mxu0 0.0
  %887 = vmatprep.subr.mxu0 0.0
  %888 = vmatpush1.msra.mxu0 0.0
  %889 = vmatprep.subr.mxu0 0.0
  %890 = vmatpush1.msra.mxu0 0.0
  %891 = vmatprep.subr.mxu0 0.0
  %892 = vmatpush1.msra.mxu0 0.0
  %893 = vmatprep.subr.mxu0 0.0
  %894 = vmatpush1.msra.mxu0 0.0
  %895 = vmatprep.subr.mxu0 0.0
  %896 = vmatpush1.msra.mxu0 0.0
  %897 = vmatprep.subr.mxu0 0.0
  %898 = vmatpush1.msra.mxu0 0.0
  %899 = vmatprep.subr.mxu0 0.0
  %900 = vmatpush1.msra.mxu0 0.0
  %901 = vmatprep.subr.mxu0 0.0
  %902 = vmatpush1.msra.mxu0 0.0
  %903 = vmatprep.subr.mxu0 0.0
  %904 = vmatpush1.msra.mxu0 0.0
  %905 = vmatprep.subr.mxu0 0.0
  %906 = vmatpush1.msra.mxu0 0.0
  %907 = vmatprep.subr.mxu0 0.0
  %908 = vmatpush1.msra.mxu0 0.0
  %909 = vmatprep.subr.mxu0 0.0
  %910 = vmatpush1.msra.mxu0 0.0
  %911 = vmatprep.subr.mxu0 0.0
  %912 = vmatpush1.msra.mxu0 0.0
  %913 = vmatprep.subr.mxu0 0.0
  %914 = vmatpush1.msra.mxu0 0.0
  %915 = vmatprep.subr.mxu0 0.0
  %916 = vmatpush1.msra.mxu0 0.0
  %917 = vmatprep.subr.mxu0 0.0
  %918 = vmatpush1.msra.mxu0 0.0
  %919 = vmatprep.subr.mxu0 0.0
  %920 = vmatpush1.msra.mxu0 0.0
  %921 = vmatprep.mubr.f32.mxu0 0.0
  %922 = vmatmul.mubr.f32.gmra.mrb[0].mxu0 %v852
  %v923 = vpop.f32.mrb[0].mxu0
  %v924 = vadd.f32 %v850, %v923
  %v925 = vpop.f32.mrb[0].mxu0
  %926 = vmatprep.mubr.f32.mxu0 0.0
  %927 = vmatmul.mubr.f32.gmra.mrb[0].mxu0 %v855
  %v928 = vpop.f32.mrb[0].mxu0
  %v929 = vadd.f32 %v850, %v928
  %v930 = vpop.f32.mrb[0].mxu0
  %931 = vdwg.mxu0
  %v932 = vmul.f32 %v924, %v924
  %v933 = vmul.f32 %v929, %v929
  %v934 = vmul.f32 %v924, %v932
  %v935 = vmul.f32 %v929, %v933
  %v936 = vmul.f32 %v934, 0.044715
  %v937 = vmul.f32 %v935, 0.044715
  %v938 = vadd.f32 %v924, %v936
  %v939 = vadd.f32 %v929, %v937
  %v940 = vmul.f32 %v938, 0.7978846
  %v941 = vmul.f32 %v939, 0.7978846
  %v942 = vtanh.pop %v940
  %v943 = vtanh.pop %v941
  %v944 = vadd.f32 %v942, 1.0
  %v945 = vadd.f32 %v943, 1.0
  %v946 = vmul.f32 %v944, 0.5
  %v947 = vmul.f32 %v945, 0.5
  %v948 = vmul.f32 %v924, %v946
  %v949 = vmul.f32 %v929, %v947
  %v950 = vlaneseq
  %v951 = vshrl.u32 %v950, 7
  %v952 = vsub.s32 0, %v951
  %v953 = vrot.slane %v119, %v952
  %vm954 = vcmask 523264
  %v956 = vsel %vm954, %v948, 0
  %v959 = vsel %vm954, %v949, 0
  %961 = vmatprep.subr.mxu0 0.0
  %962 = vmatpush1.msra.mxu0 %v125
  %963 = vmatprep.subr.mxu0 0.0
  %964 = vmatpush1.msra.mxu0 %v126
  %965 = vmatprep.subr.mxu0 0.0
  %966 = vmatpush1.msra.mxu0 %v127
  %967 = vmatprep.subr.mxu0 0.0
  %968 = vmatpush1.msra.mxu0 %v128
  %969 = vmatprep.subr.mxu0 0.0
  %970 = vmatpush1.msra.mxu0 %v129
  %971 = vmatprep.subr.mxu0 0.0
  %972 = vmatpush1.msra.mxu0 %v130
  %973 = vmatprep.subr.mxu0 0.0
  %974 = vmatpush1.msra.mxu0 %v131
  %975 = vmatprep.subr.mxu0 0.0
  %976 = vmatpush1.msra.mxu0 %v132
  %977 = vmatprep.subr.mxu0 0.0
  %978 = vmatpush1.msra.mxu0 0.0
  %979 = vmatprep.subr.mxu0 0.0
  %980 = vmatpush1.msra.mxu0 0.0
  %981 = vmatprep.subr.mxu0 0.0
  %982 = vmatpush1.msra.mxu0 0.0
  %983 = vmatprep.subr.mxu0 0.0
  %984 = vmatpush1.msra.mxu0 0.0
  %985 = vmatprep.subr.mxu0 0.0
  %986 = vmatpush1.msra.mxu0 0.0
  %987 = vmatprep.subr.mxu0 0.0
  %988 = vmatpush1.msra.mxu0 0.0
  %989 = vmatprep.subr.mxu0 0.0
  %990 = vmatpush1.msra.mxu0 0.0
  %991 = vmatprep.subr.mxu0 0.0
  %992 = vmatpush1.msra.mxu0 0.0
  %993 = vmatprep.subr.mxu0 0.0
  %994 = vmatpush1.msra.mxu0 0.0
  %995 = vmatprep.subr.mxu0 0.0
  %996 = vmatpush1.msra.mxu0 0.0
  %997 = vmatprep.subr.mxu0 0.0
  %998 = vmatpush1.msra.mxu0 0.0
  %999 = vmatprep.subr.mxu0 0.0
  %1000 = vmatpush1.msra.mxu0 0.0
  %1001 = vmatprep.subr.mxu0 0.0
  %1002 = vmatpush1.msra.mxu0 0.0
  %1003 = vmatprep.subr.mxu0 0.0
  %1004 = vmatpush1.msra.mxu0 0.0
  %1005 = vmatprep.subr.mxu0 0.0
  %1006 = vmatpush1.msra.mxu0 0.0
  %1007 = vmatprep.subr.mxu0 0.0
  %1008 = vmatpush1.msra.mxu0 0.0
  %1009 = vmatprep.subr.mxu0 0.0
  %1010 = vmatpush1.msra.mxu0 0.0
  %1011 = vmatprep.subr.mxu0 0.0
  %1012 = vmatpush1.msra.mxu0 0.0
  %1013 = vmatprep.subr.mxu0 0.0
  %1014 = vmatpush1.msra.mxu0 0.0
  %1015 = vmatprep.subr.mxu0 0.0
  %1016 = vmatpush1.msra.mxu0 0.0
  %1017 = vmatprep.subr.mxu0 0.0
  %1018 = vmatpush1.msra.mxu0 0.0
  %1019 = vmatprep.subr.mxu0 0.0
  %1020 = vmatpush1.msra.mxu0 0.0
  %1021 = vmatprep.subr.mxu0 0.0
  %1022 = vmatpush1.msra.mxu0 0.0
  %1023 = vmatprep.subr.mxu0 0.0
  %1024 = vmatpush1.msra.mxu0 0.0
  %1025 = vmatprep.mubr.f32.mxu0 0.0
  %1026 = vmatmul.mubr.f32.gmra.mrb[0].mxu0 %v956
  %v1027 = vpop.f32.mrb[0].mxu0
  %v1028 = vadd.f32 %v953, %v1027
  %v1029 = vpop.f32.mrb[0].mxu0
  %1030 = vmatprep.mubr.f32.mxu0 0.0
  %1031 = vmatmul.mubr.f32.gmra.mrb[0].mxu0 %v959
  %v1032 = vpop.f32.mrb[0].mxu0
  %v1033 = vadd.f32 %v953, %v1032
  %v1034 = vpop.f32.mrb[0].mxu0
  %1035 = vdwg.mxu0
  %v1036 = vadd.f32 %v807, %v1028
  %v1037 = vadd.f32 %v808, %v1033
  %v1038 = vsel %vm396, %v1036, 0.0
  %1039 = vadd.xlane.f32.xlu0 %v1038
  %v1040 = vpop.xlane.xlu0 %1039
  %v1041 = vsel %vm396, %v1037, 0.0
  %1042 = vadd.xlane.f32.xlu0 %v1041
  %v1043 = vpop.xlane.xlu0 %1042
  %v1044 = vmul.f32 %v1040, %v403
  %v1045 = vmul.f32 %v1043, %v403
  %v1046 = vsub.f32 %v1036, %v1044
  %v1047 = vsub.f32 %v1037, %v1045
  %v1048 = vmul.f32 %v1046, %v1046
  %v1049 = vmul.f32 %v1047, %v1047
  %v1050 = vsel %vm396, %v1048, 0.0
  %1051 = vadd.xlane.f32.xlu0 %v1050
  %v1052 = vpop.xlane.xlu0 %1051
  %v1053 = vsel %vm396, %v1049, 0.0
  %1054 = vadd.xlane.f32.xlu0 %v1053
  %v1055 = vpop.xlane.xlu0 %1054
  %v1056 = vmul.f32 %v1052, %v403
  %v1057 = vmul.f32 %v1055, %v403
  %v1058 = vadd.f32 %v1056, 1e-05
  %v1059 = vadd.f32 %v1057, 1e-05
  %v1060 = vrsqrt.pop %v1058
  %v1061 = vrsqrt.pop %v1059
  %v1062 = vmul.f32 %v1046, %v1060
  %v1063 = vmul.f32 %v1047, %v1061
  %v1064 = vlaneseq
  %v1065 = vshrl.u32 %v1064, 7
  %v1066 = vsub.s32 0, %v1065
  %v1067 = vrot.slane %v116, %v1066
  %v1068 = vmul.f32 %v1062, %v1067
  %v1069 = vmul.f32 %v1063, %v1067
  %v1070 = vlaneseq
  %v1071 = vshrl.u32 %v1070, 7
  %v1072 = vsub.s32 0, %v1071
  %v1073 = vrot.slane %v117, %v1072
  %v1074 = vadd.f32 %v1068, %v1073
  %v1075 = vadd.f32 %v1069, %v1073
  %v1076 = vlaneseq
  %v1077 = vshrl.u32 %v1076, 7
  %v1078 = vsub.s32 0, %v1077
  %v1079 = vrot.slane %v152, %v1078
  %v1081 = vsel %vm396, %v1074, 0
  %v1084 = vsel %vm396, %v1075, 0
  %1086 = vmatprep.subr.mxu0 0.0
  %1087 = vmatpush1.msra.mxu0 %v148
  %1088 = vmatprep.subr.mxu0 0.0
  %1089 = vmatpush1.msra.mxu0 %v149
  %1090 = vmatprep.subr.mxu0 0.0
  %1091 = vmatpush1.msra.mxu0 %v150
  %1092 = vmatprep.subr.mxu0 0.0
  %1093 = vmatpush1.msra.mxu0 %v151
  %1094 = vmatprep.subr.mxu0 0.0
  %1095 = vmatpush1.msra.mxu0 0.0
  %1096 = vmatprep.subr.mxu0 0.0
  %1097 = vmatpush1.msra.mxu0 0.0
  %1098 = vmatprep.subr.mxu0 0.0
  %1099 = vmatpush1.msra.mxu0 0.0
  %1100 = vmatprep.subr.mxu0 0.0
  %1101 = vmatpush1.msra.mxu0 0.0
  %1102 = vmatprep.subr.mxu0 0.0
  %1103 = vmatpush1.msra.mxu0 0.0
  %1104 = vmatprep.subr.mxu0 0.0
  %1105 = vmatpush1.msra.mxu0 0.0
  %1106 = vmatprep.subr.mxu0 0.0
  %1107 = vmatpush1.msra.mxu0 0.0
  %1108 = vmatprep.subr.mxu0 0.0
  %1109 = vmatpush1.msra.mxu0 0.0
  %1110 = vmatprep.subr.mxu0 0.0
  %1111 = vmatpush1.msra.mxu0 0.0
  %1112 = vmatprep.subr.mxu0 0.0
  %1113 = vmatpush1.msra.mxu0 0.0
  %1114 = vmatprep.subr.mxu0 0.0
  %1115 = vmatpush1.msra.mxu0 0.0
  %1116 = vmatprep.subr.mxu0 0.0
  %1117 = vmatpush1.msra.mxu0 0.0
  %1118 = vmatprep.subr.mxu0 0.0
  %1119 = vmatpush1.msra.mxu0 0.0
  %1120 = vmatprep.subr.mxu0 0.0
  %1121 = vmatpush1.msra.mxu0 0.0
  %1122 = vmatprep.subr.mxu0 0.0
  %1123 = vmatpush1.msra.mxu0 0.0
  %1124 = vmatprep.subr.mxu0 0.0
  %1125 = vmatpush1.msra.mxu0 0.0
  %1126 = vmatprep.subr.mxu0 0.0
  %1127 = vmatpush1.msra.mxu0 0.0
  %1128 = vmatprep.subr.mxu0 0.0
  %1129 = vmatpush1.msra.mxu0 0.0
  %1130 = vmatprep.subr.mxu0 0.0
  %1131 = vmatpush1.msra.mxu0 0.0
  %1132 = vmatprep.subr.mxu0 0.0
  %1133 = vmatpush1.msra.mxu0 0.0
  %1134 = vmatprep.subr.mxu0 0.0
  %1135 = vmatpush1.msra.mxu0 0.0
  %1136 = vmatprep.subr.mxu0 0.0
  %1137 = vmatpush1.msra.mxu0 0.0
  %1138 = vmatprep.subr.mxu0 0.0
  %1139 = vmatpush1.msra.mxu0 0.0
  %1140 = vmatprep.subr.mxu0 0.0
  %1141 = vmatpush1.msra.mxu0 0.0
  %1142 = vmatprep.subr.mxu0 0.0
  %1143 = vmatpush1.msra.mxu0 0.0
  %1144 = vmatprep.subr.mxu0 0.0
  %1145 = vmatpush1.msra.mxu0 0.0
  %1146 = vmatprep.subr.mxu0 0.0
  %1147 = vmatpush1.msra.mxu0 0.0
  %1148 = vmatprep.subr.mxu0 0.0
  %1149 = vmatpush1.msra.mxu0 0.0
  %1150 = vmatprep.mubr.f32.mxu0 0.0
  %1151 = vmatmul.mubr.f32.gmra.mrb[0].mxu0 %v1081
  %v1152 = vpop.f32.mrb[0].mxu0
  %v1153 = vadd.f32 %v1079, %v1152
  %v1154 = vpop.f32.mrb[0].mxu0
  %1155 = vmatprep.mubr.f32.mxu0 0.0
  %1156 = vmatmul.mubr.f32.gmra.mrb[0].mxu0 %v1084
  %v1157 = vpop.f32.mrb[0].mxu0
  %v1158 = vadd.f32 %v1079, %v1157
  %v1159 = vpop.f32.mrb[0].mxu0
  %1160 = vdwg.mxu0
  %v1161 = vmul.f32 %v1153, %v1153
  %v1162 = vmul.f32 %v1158, %v1158
  %v1163 = vsel %vm396, %v1161, 0.0
  %1164 = vadd.xlane.f32.xlu0 %v1163
  %v1165 = vpop.xlane.xlu0 %1164
  %v1166 = vsel %vm396, %v1162, 0.0
  %1167 = vadd.xlane.f32.xlu0 %v1166
  %v1168 = vpop.xlane.xlu0 %1167
  %v1169 = vadd.f32 %v1165, 1e-06
  %v1170 = vadd.f32 %v1168, 1e-06
  %v1171 = vrsqrt.pop %v1169
  %v1172 = vrsqrt.pop %v1170
  %v1173 = vmul.f32 %v1153, %v1171
  %v1174 = vmul.f32 %v1158, %v1172
  %v1175 = vmul.f32 %v137, %v137
  %vm1176 = vcmask 257024
  %v1177 = vsel %vm1176, %v1175, 0.0
  %1178 = vadd.xlane.f32.xlu0 %v1177
  %v1179 = vpop.xlane.xlu0 %1178
  %v1180 = vadd.f32 %v1179, 1e-06
  %v1181 = vrsqrt.pop %v1180
  %v1182 = vmul.f32 %v137, %v1181
  %vm1183 = vcmp.gt.f32.partialorder %v1153, 0.0
  %vm1184 = vcmp.gt.f32.partialorder %v1158, 0.0
  %v1185 = vmin.f32 %v1153, 0.0
  %v1186 = vmin.f32 %v1158, 0.0
  %v1187 = vmul.f32 %v1185, 1.442695
  %v1188 = vpow.pop %v1187
  %v1189 = vmul.f32 %v1186, 1.442695
  %v1190 = vpow.pop %v1189
  %v1191 = vsub.f32 %v1188, 1.0
  %v1192 = vsub.f32 %v1190, 1.0
  %v1193 = vsel %vm1183, %v1153, %v1191
  %v1194 = vsel %vm1184, %v1158, %v1192
  %v1195 = vadd.f32 %v1193, 1.0
  %v1196 = vadd.f32 %v1194, 1.0
  %1198 = vset.pattern.permute.xlu0 64
  %1199 = vperm.xlu0 %1198, %v1153
  %v1200 = vpop.permute.xlu0 %1199
  %1203 = vset.pattern.permute.xlu0 64
  %1204 = vperm.xlu0 %1203, %v1158
  %v1205 = vpop.permute.xlu0 %1204
  %v1208 = vsel %vm396, %v1173, 0
  %v1211 = vsel %vm396, %v1174, 0
  %v1214 = vsel %vm396, %v1182, 0
  %1216 = vmatprep.subr.mxu0 0.0
  %1217 = vmatpush1.xpose.msra.mxu0 %v1214
  %1218 = vmatprep.subr.mxu0 0.0
  %1219 = vmatpush1.xpose.msra.mxu0 0.0
  %1220 = vmatprep.subr.mxu0 0.0
  %1221 = vmatpush1.xpose.msra.mxu0 0.0
  %1222 = vmatprep.subr.mxu0 0.0
  %1223 = vmatpush1.xpose.msra.mxu0 0.0
  %1224 = vmatprep.subr.mxu0 0.0
  %1225 = vmatpush1.xpose.msra.mxu0 0.0
  %1226 = vmatprep.subr.mxu0 0.0
  %1227 = vmatpush1.xpose.msra.mxu0 0.0
  %1228 = vmatprep.subr.mxu0 0.0
  %1229 = vmatpush1.xpose.msra.mxu0 0.0
  %1230 = vmatprep.subr.mxu0 0.0
  %1231 = vmatpush1.xpose.msra.mxu0 0.0
  %1232 = vmatprep.subr.mxu0 0.0
  %1233 = vmatpush1.xpose.msra.mxu0 0.0
  %1234 = vmatprep.subr.mxu0 0.0
  %1235 = vmatpush1.xpose.msra.mxu0 0.0
  %1236 = vmatprep.subr.mxu0 0.0
  %1237 = vmatpush1.xpose.msra.mxu0 0.0
  %1238 = vmatprep.subr.mxu0 0.0
  %1239 = vmatpush1.xpose.msra.mxu0 0.0
  %1240 = vmatprep.subr.mxu0 0.0
  %1241 = vmatpush1.xpose.msra.mxu0 0.0
  %1242 = vmatprep.subr.mxu0 0.0
  %1243 = vmatpush1.xpose.msra.mxu0 0.0
  %1244 = vmatprep.subr.mxu0 0.0
  %1245 = vmatpush1.xpose.msra.mxu0 0.0
  %1246 = vmatprep.subr.mxu0 0.0
  %1247 = vmatpush1.xpose.msra.mxu0 0.0
  %1248 = vmatprep.subr.mxu0 0.0
  %1249 = vmatpush1.xpose.msra.mxu0 0.0
  %1250 = vmatprep.subr.mxu0 0.0
  %1251 = vmatpush1.xpose.msra.mxu0 0.0
  %1252 = vmatprep.subr.mxu0 0.0
  %1253 = vmatpush1.xpose.msra.mxu0 0.0
  %1254 = vmatprep.subr.mxu0 0.0
  %1255 = vmatpush1.xpose.msra.mxu0 0.0
  %1256 = vmatprep.subr.mxu0 0.0
  %1257 = vmatpush1.xpose.msra.mxu0 0.0
  %1258 = vmatprep.subr.mxu0 0.0
  %1259 = vmatpush1.xpose.msra.mxu0 0.0
  %1260 = vmatprep.subr.mxu0 0.0
  %1261 = vmatpush1.xpose.msra.mxu0 0.0
  %1262 = vmatprep.subr.mxu0 0.0
  %1263 = vmatpush1.xpose.msra.mxu0 0.0
  %1264 = vmatprep.subr.mxu0 0.0
  %1265 = vmatpush1.xpose.msra.mxu0 0.0
  %1266 = vmatprep.subr.mxu0 0.0
  %1267 = vmatpush1.xpose.msra.mxu0 0.0
  %1268 = vmatprep.subr.mxu0 0.0
  %1269 = vmatpush1.xpose.msra.mxu0 0.0
  %1270 = vmatprep.subr.mxu0 0.0
  %1271 = vmatpush1.xpose.msra.mxu0 0.0
  %1272 = vmatprep.subr.mxu0 0.0
  %1273 = vmatpush1.xpose.msra.mxu0 0.0
  %1274 = vmatprep.subr.mxu0 0.0
  %1275 = vmatpush1.xpose.msra.mxu0 0.0
  %1276 = vmatprep.subr.mxu0 0.0
  %1277 = vmatpush1.xpose.msra.mxu0 0.0
  %1278 = vmatprep.subr.mxu0 0.0
  %1279 = vmatpush1.xpose.msra.mxu0 0.0
  %1280 = vmatprep.mubr.f32.mxu0 0.0
  %1281 = vmatmul.mubr.f32.gmra.mrb[0].mxu0 %v1208
  %v1282 = vpop.f32.mrb[0].mxu0
  %v1283 = vadd.f32 %v1200, %v1282
  %v1284 = vpop.f32.mrb[0].mxu0
  %1285 = vmatprep.mubr.f32.mxu0 0.0
  %1286 = vmatmul.mubr.f32.gmra.mrb[0].mxu0 %v1211
  %v1287 = vpop.f32.mrb[0].mxu0
  %v1288 = vadd.f32 %v1205, %v1287
  %v1289 = vpop.f32.mrb[0].mxu0
  %1290 = vdwg.mxu0
  %1292 = vset.pattern.permute.xlu0 65
  %1293 = vperm.xlu0 %1292, %v1195
  %v1294 = vpop.permute.xlu0 %1293
  %1297 = vset.pattern.permute.xlu0 65
  %1298 = vperm.xlu0 %1297, %v1196
  %v1299 = vpop.permute.xlu0 %1298
  %v1301 = vmul.f32 %v1283, %v1294
  %v1302 = vmul.f32 %v1288, %v1299
  %v1303 = vmul.f32 %v1153, %v1161
  %v1304 = vmul.f32 %v1158, %v1162
  %v1305 = vmul.f32 %v1303, 0.044715
  %v1306 = vmul.f32 %v1304, 0.044715
  %v1307 = vadd.f32 %v1153, %v1305
  %v1308 = vadd.f32 %v1158, %v1306
  %v1309 = vmul.f32 %v1307, 0.7978846
  %v1310 = vmul.f32 %v1308, 0.7978846
  %v1311 = vtanh.pop %v1309
  %v1312 = vtanh.pop %v1310
  %v1313 = vadd.f32 %v1311, 1.0
  %v1314 = vadd.f32 %v1312, 1.0
  %v1315 = vmul.f32 %v1313, 0.5
  %v1316 = vmul.f32 %v1314, 0.5
  %v1317 = vmul.f32 %v1153, %v1315
  %v1318 = vmul.f32 %v1158, %v1316
  %v1319 = vlaneseq
  %v1320 = vshrl.u32 %v1319, 7
  %v1321 = vsub.s32 0, %v1320
  %v1322 = vrot.slane %v120, %v1321
  %1325 = vrot.lane.b32.xlu0 %v1317, 96
  %v1326 = vpop.permute.xlu0 %1325
  %1327 = vrot.lane.b32.xlu0 %v1318, 96
  %v1328 = vpop.permute.xlu0 %1327
  %v1329 = vsel %vm396, %v1326, 0
  %v1331 = vsel %vm396, %v1328, 0
  %1333 = vmatprep.subr.mxu0 0.0
  %1334 = vmatpush1.msra.mxu0 %v133
  %1335 = vmatprep.subr.mxu0 0.0
  %1336 = vmatpush1.msra.mxu0 %v134
  %1337 = vmatprep.subr.mxu0 0.0
  %1338 = vmatpush1.msra.mxu0 %v135
  %1339 = vmatprep.subr.mxu0 0.0
  %1340 = vmatpush1.msra.mxu0 %v136
  %1341 = vmatprep.subr.mxu0 0.0
  %1342 = vmatpush1.msra.mxu0 0.0
  %1343 = vmatprep.subr.mxu0 0.0
  %1344 = vmatpush1.msra.mxu0 0.0
  %1345 = vmatprep.subr.mxu0 0.0
  %1346 = vmatpush1.msra.mxu0 0.0
  %1347 = vmatprep.subr.mxu0 0.0
  %1348 = vmatpush1.msra.mxu0 0.0
  %1349 = vmatprep.subr.mxu0 0.0
  %1350 = vmatpush1.msra.mxu0 0.0
  %1351 = vmatprep.subr.mxu0 0.0
  %1352 = vmatpush1.msra.mxu0 0.0
  %1353 = vmatprep.subr.mxu0 0.0
  %1354 = vmatpush1.msra.mxu0 0.0
  %1355 = vmatprep.subr.mxu0 0.0
  %1356 = vmatpush1.msra.mxu0 0.0
  %1357 = vmatprep.subr.mxu0 0.0
  %1358 = vmatpush1.msra.mxu0 0.0
  %1359 = vmatprep.subr.mxu0 0.0
  %1360 = vmatpush1.msra.mxu0 0.0
  %1361 = vmatprep.subr.mxu0 0.0
  %1362 = vmatpush1.msra.mxu0 0.0
  %1363 = vmatprep.subr.mxu0 0.0
  %1364 = vmatpush1.msra.mxu0 0.0
  %1365 = vmatprep.subr.mxu0 0.0
  %1366 = vmatpush1.msra.mxu0 0.0
  %1367 = vmatprep.subr.mxu0 0.0
  %1368 = vmatpush1.msra.mxu0 0.0
  %1369 = vmatprep.subr.mxu0 0.0
  %1370 = vmatpush1.msra.mxu0 0.0
  %1371 = vmatprep.subr.mxu0 0.0
  %1372 = vmatpush1.msra.mxu0 0.0
  %1373 = vmatprep.subr.mxu0 0.0
  %1374 = vmatpush1.msra.mxu0 0.0
  %1375 = vmatprep.subr.mxu0 0.0
  %1376 = vmatpush1.msra.mxu0 0.0
  %1377 = vmatprep.subr.mxu0 0.0
  %1378 = vmatpush1.msra.mxu0 0.0
  %1379 = vmatprep.subr.mxu0 0.0
  %1380 = vmatpush1.msra.mxu0 0.0
  %1381 = vmatprep.subr.mxu0 0.0
  %1382 = vmatpush1.msra.mxu0 0.0
  %1383 = vmatprep.subr.mxu0 0.0
  %1384 = vmatpush1.msra.mxu0 0.0
  %1385 = vmatprep.subr.mxu0 0.0
  %1386 = vmatpush1.msra.mxu0 0.0
  %1387 = vmatprep.subr.mxu0 0.0
  %1388 = vmatpush1.msra.mxu0 0.0
  %1389 = vmatprep.subr.mxu0 0.0
  %1390 = vmatpush1.msra.mxu0 0.0
  %1391 = vmatprep.subr.mxu0 0.0
  %1392 = vmatpush1.msra.mxu0 0.0
  %1393 = vmatprep.subr.mxu0 0.0
  %1394 = vmatpush1.msra.mxu0 0.0
  %1395 = vmatprep.subr.mxu0 0.0
  %1396 = vmatpush1.msra.mxu0 0.0
  %1397 = vmatprep.mubr.f32.mxu0 0.0
  %1398 = vmatmul.mubr.f32.gmra.mrb[0].mxu0 %v1329
  %v1399 = vpop.f32.mrb[0].mxu0
  %v1400 = vadd.f32 %v1322, %v1399
  %v1401 = vpop.f32.mrb[0].mxu0
  %1402 = vmatprep.mubr.f32.mxu0 0.0
  %1403 = vmatmul.mubr.f32.gmra.mrb[0].mxu0 %v1331
  %v1404 = vpop.f32.mrb[0].mxu0
  %v1405 = vadd.f32 %v1322, %v1404
  %v1406 = vpop.f32.mrb[0].mxu0
  %1407 = vdwg.mxu0
  %v1408 = vmul.f32 %v1400, %v1400
  %v1409 = vmul.f32 %v1405, %v1405
  %v1410 = vmul.f32 %v1400, %v1408
  %v1411 = vmul.f32 %v1405, %v1409
  %v1412 = vmul.f32 %v1410, 0.044715
  %v1413 = vmul.f32 %v1411, 0.044715
  %v1414 = vadd.f32 %v1400, %v1412
  %v1415 = vadd.f32 %v1405, %v1413
  %v1416 = vmul.f32 %v1414, 0.7978846
  %v1417 = vmul.f32 %v1415, 0.7978846
  %v1418 = vtanh.pop %v1416
  %v1419 = vtanh.pop %v1417
  %v1420 = vadd.f32 %v1418, 1.0
  %v1421 = vadd.f32 %v1419, 1.0
  %v1422 = vmul.f32 %v1420, 0.5
  %v1423 = vmul.f32 %v1421, 0.5
  %v1424 = vmul.f32 %v1400, %v1422
  %v1425 = vmul.f32 %v1405, %v1423
  %v1427 = vsel %vm396, %v1424, 0
  %v1430 = vsel %vm396, %v1425, 0
  %1432 = vmatprep.subr.mxu0 0.0
  %1433 = vmatpush1.msra.mxu0 %v153
  %1434 = vmatprep.subr.mxu0 0.0
  %1435 = vmatpush1.msra.mxu0 %v154
  %1436 = vmatprep.subr.mxu0 0.0
  %1437 = vmatpush1.msra.mxu0 %v155
  %1438 = vmatprep.subr.mxu0 0.0
  %1439 = vmatpush1.msra.mxu0 %v156
  %1440 = vmatprep.subr.mxu0 0.0
  %1441 = vmatpush1.msra.mxu0 0.0
  %1442 = vmatprep.subr.mxu0 0.0
  %1443 = vmatpush1.msra.mxu0 0.0
  %1444 = vmatprep.subr.mxu0 0.0
  %1445 = vmatpush1.msra.mxu0 0.0
  %1446 = vmatprep.subr.mxu0 0.0
  %1447 = vmatpush1.msra.mxu0 0.0
  %1448 = vmatprep.subr.mxu0 0.0
  %1449 = vmatpush1.msra.mxu0 0.0
  %1450 = vmatprep.subr.mxu0 0.0
  %1451 = vmatpush1.msra.mxu0 0.0
  %1452 = vmatprep.subr.mxu0 0.0
  %1453 = vmatpush1.msra.mxu0 0.0
  %1454 = vmatprep.subr.mxu0 0.0
  %1455 = vmatpush1.msra.mxu0 0.0
  %1456 = vmatprep.subr.mxu0 0.0
  %1457 = vmatpush1.msra.mxu0 0.0
  %1458 = vmatprep.subr.mxu0 0.0
  %1459 = vmatpush1.msra.mxu0 0.0
  %1460 = vmatprep.subr.mxu0 0.0
  %1461 = vmatpush1.msra.mxu0 0.0
  %1462 = vmatprep.subr.mxu0 0.0
  %1463 = vmatpush1.msra.mxu0 0.0
  %1464 = vmatprep.subr.mxu0 0.0
  %1465 = vmatpush1.msra.mxu0 0.0
  %1466 = vmatprep.subr.mxu0 0.0
  %1467 = vmatpush1.msra.mxu0 0.0
  %1468 = vmatprep.subr.mxu0 0.0
  %1469 = vmatpush1.msra.mxu0 0.0
  %1470 = vmatprep.subr.mxu0 0.0
  %1471 = vmatpush1.msra.mxu0 0.0
  %1472 = vmatprep.subr.mxu0 0.0
  %1473 = vmatpush1.msra.mxu0 0.0
  %1474 = vmatprep.subr.mxu0 0.0
  %1475 = vmatpush1.msra.mxu0 0.0
  %1476 = vmatprep.subr.mxu0 0.0
  %1477 = vmatpush1.msra.mxu0 0.0
  %1478 = vmatprep.subr.mxu0 0.0
  %1479 = vmatpush1.msra.mxu0 0.0
  %1480 = vmatprep.subr.mxu0 0.0
  %1481 = vmatpush1.msra.mxu0 0.0
  %1482 = vmatprep.subr.mxu0 0.0
  %1483 = vmatpush1.msra.mxu0 0.0
  %1484 = vmatprep.subr.mxu0 0.0
  %1485 = vmatpush1.msra.mxu0 0.0
  %1486 = vmatprep.subr.mxu0 0.0
  %1487 = vmatpush1.msra.mxu0 0.0
  %1488 = vmatprep.subr.mxu0 0.0
  %1489 = vmatpush1.msra.mxu0 0.0
  %1490 = vmatprep.subr.mxu0 0.0
  %1491 = vmatpush1.msra.mxu0 0.0
  %1492 = vmatprep.subr.mxu0 0.0
  %1493 = vmatpush1.msra.mxu0 0.0
  %1494 = vmatprep.subr.mxu0 0.0
  %1495 = vmatpush1.msra.mxu0 0.0
  %1496 = vmatprep.mubr.f32.mxu0 0.0
  %1497 = vmatmul.mubr.f32.gmra.mrb[0].mxu0 %v1427
  %v1498 = vpop.f32.mrb[0].mxu0
  %v1499 = vadd.f32 %v157, %v1498
  %v1500 = vpop.f32.mrb[0].mxu0
  %1501 = vmatprep.mubr.f32.mxu0 0.0
  %1502 = vmatmul.mubr.f32.gmra.mrb[0].mxu0 %v1430
  %v1503 = vpop.f32.mrb[0].mxu0
  %v1504 = vadd.f32 %v158, %v1503
  %v1505 = vpop.f32.mrb[0].mxu0
  %1506 = vdwg.mxu0
  %v1507 = vxor.u32 %v1499, 2147483648
  %v1508 = vxor.u32 %v1504, 2147483648
  %v1509 = vmul.f32 %v1507, 1.442695
  %v1510 = vpow.pop %v1509
  %v1511 = vmul.f32 %v1508, 1.442695
  %v1512 = vpow.pop %v1511
  %v1513 = vadd.f32 %v1510, 1.0
  %v1514 = vadd.f32 %v1512, 1.0
  %v1515 = vrcp.pop %v1513
  %v1516 = vmul.f32 1.0, %v1515
  %v1517 = vrcp.pop %v1514
  %v1518 = vmul.f32 1.0, %v1517
  %vm1519 = vcmask 31744
  %v1520 = vsel %vm1519, %v1301, -inf
  %1521 = vmax.xlane.f32.xlu0 %v1520
  %v1522 = vpop.xlane.xlu0 %1521
  %v1523 = vsel %vm1519, %v1302, -inf
  %1524 = vmax.xlane.f32.xlu0 %v1523
  %v1525 = vpop.xlane.xlu0 %1524
  %v1526 = vxor.u32 %v1522, 2147483648
  %v1527 = vxor.u32 %v1525, 2147483648
  %v1528 = vmul.f32 %v1526, 1.442695
  %v1529 = vpow.pop %v1528
  %v1530 = vmul.f32 %v1527, 1.442695
  %v1531 = vpow.pop %v1530
  %v1532 = vadd.f32 %v1529, 1.0
  %v1533 = vadd.f32 %v1531, 1.0
  %v1534 = vrcp.pop %v1532
  %v1535 = vmul.f32 1.0, %v1534
  %v1536 = vrcp.pop %v1533
  %v1537 = vmul.f32 1.0, %v1536
  %v1538 = vlaneseq
  %v1539 = vand.u32 %v1538, 127
  %v1540 = vcvt.s32.f32 %v1539
  %vm1541 = vcmp.ge.f32.partialorder %v1301, %v1522
  %vm1542 = vcmp.ge.f32.partialorder %v1302, %v1525
  %v1543 = vsel %vm1541, %v1540, 4.0
  %v1544 = vsel %vm1542, %v1540, 4.0
  %v1545 = vsel %vm1519, %v1543, inf
  %1546 = vmin.xlane.f32.xlu0 %v1545
  %v1547 = vpop.xlane.xlu0 %1546
  %v1548 = vsel %vm1519, %v1544, inf
  %1549 = vmin.xlane.f32.xlu0 %v1548
  %v1550 = vpop.xlane.xlu0 %1549
  %v1551 = vlaneseq
  %v1552 = vshrl.u32 %v1551, 7
  %v1553 = vadd.s32 %v1552, 8
  %v1554 = vcvt.s32.f32 %v1552
  %v1555 = vcvt.s32.f32 %v1553
  %v1556 = vmax.f32 %v1535, %v1537
  %v1557 = vrot.slane %v1556, 4
  %v1558 = vmax.f32 %v1556, %v1557
  %v1559 = vrot.slane %v1558, 2
  %v1560 = vmax.f32 %v1558, %v1559
  %v1561 = vrot.slane %v1560, 1
  %v1562 = vmax.f32 %v1560, %v1561
  %vm1563 = vcmp.ge.f32.partialorder %v1535, %v1562
  %vm1564 = vcmp.ge.f32.partialorder %v1537, %v1562
  %v1565 = vsel %vm1563, %v1554, 16.0
  %v1566 = vsel %vm1564, %v1555, 16.0
  %v1567 = vmin.f32 %v1565, %v1566
  %v1568 = vrot.slane %v1567, 4
  %v1569 = vmin.f32 %v1567, %v1568
  %v1570 = vrot.slane %v1569, 2
  %v1571 = vmin.f32 %v1569, %v1570
  %v1572 = vrot.slane %v1571, 1
  %v1573 = vmin.f32 %v1571, %v1572
  %vm1574 = vcmp.eq.f32.partialorder %v1554, %v1573
  %vm1575 = vcmp.eq.f32.partialorder %v1555, %v1573
  %v1576 = vsel %vm1574, 1, 0
  %v1577 = vsel %vm1575, 1, 0
  %vm1578 = vcmp.eq.s32.totalorder %v1576, 1
  %vm1579 = vcmp.eq.s32.totalorder %v1577, 1
  %v1580 = vsel %vm1578, %v1516, 0.0
  %v1581 = vsel %vm1579, %v1518, 0.0
  %v1582 = vsel %vm1519, %v1580, 0.0
  %v1583 = vsel %vm1519, %v1581, 0.0
  %v1584 = vadd.f32 %v1582, %v1583
  %v1585 = vrot.slane %v1584, 4
  %v1586 = vadd.f32 %v1584, %v1585
  %v1587 = vrot.slane %v1586, 2
  %v1588 = vadd.f32 %v1586, %v1587
  %v1589 = vrot.slane %v1588, 1
  %v1590 = vadd.f32 %v1588, %v1589
  %v1591 = vmul.f32 %v1590, 0.5
  %1593 = vrot.lane.b32.xlu0 %v1591, 126
  %v1594 = vpop.permute.xlu0 %1593
  %v1596 = vadd.f32 %v1590, %v1594
  %vm1597 = vcmask 7168
  %v1598 = vsel %vm1597, %v1590, %v1596
  %v1599 = vlaneseq
  %v1600 = vshrl.u32 %v1599, 7
  %v1601 = vsub.s32 0, %v1600
  %v1602 = vrot.slane %v1598, %v1601
  %1605 = vrot.lane.b32.xlu0 %v1516, 4
  %v1606 = vpop.permute.xlu0 %1605
  %1607 = vrot.lane.b32.xlu0 %v1518, 4
  %v1608 = vpop.permute.xlu0 %1607
  %1612 = vrot.lane.b32.xlu0 %v1602, 10
  %v1613 = vpop.permute.xlu0 %1612
  %v1615 = vsel %vm1519, %v1301, %v1606
  %v1616 = vsel %vm1519, %v1302, %v1608
  %vm1617 = vcmask 64512
  %v1618 = vsel %vm1617, %v1615, %v1535
  %v1619 = vsel %vm1617, %v1616, %v1537
  %vm1620 = vcmask 72704
  %v1621 = vsel %vm1620, %v1618, %v1547
  %v1622 = vsel %vm1620, %v1619, %v1550
  %vm1623 = vcmask 80896
  %v1624 = vsel %vm1623, %v1621, %v1613
  %v1625 = vsel %vm1623, %v1622, %v1613
  %vm1626 = vcmask 97280
  %v1627 = vsel %vm1626, %v1624, %v1573
  %v1628 = vsel %vm1626, %v1625, %v1573
  %vm1629 = vcmask 105472
  %v1630 = vsel %vm1629, %v1627, 0.0
  %v1631 = vsel %vm1629, %v1628, 0.0
  %1632 = vst [vmem:[%s3] sm:$0xff] %v1630
  %1633 = vst [vmem:[%s3 + $0x8] sm:$0xff] %v1631
  // Predicated region
  $region14: #{owlv2_forward.1} parent=0 // pred_check
    _
  $region15: #{owlv2_forward.1} parent=0 // pred_check_branch
    %1635 = sbr.rel (0) target = $region17
  $region16: #{owlv2_forward.1} parent=0 // pred_region
    _
  $region17: #{owlv2_forward.1} parent=0 // pred_fallthru
    _
  // Predicated region
  $region18: #{owlv2_forward.1} parent=0 // pred_check
    _
  $region19: #{owlv2_forward.1} parent=0 // pred_check_branch
    %1637 = sbr.rel (0) target = $region21
  $region20: #{owlv2_forward.1} parent=0 // pred_region
    _
  $region21: #{owlv2_forward.1} parent=0 // pred_fallthru
    _

</llo_original>
